<compile_context>
chip_gen: v6e
topology: v6e:2x2x1
jax: 0.10.0
libtpu: 0.0.40
codegen_flags: <defaults>
</compile_context>

<pallas_src>
import functools

import jax
import jax.numpy as jnp
import numpy as np
from jax.experimental import pallas as pl
from jax.experimental.pallas import tpu as pltpu


def _bf16_exp_supported():
    # bf16 EUP exists on v6e / v7x; keep exp in f32 on older generations (v5e etc.).
    try:
        kind = jax.devices()[0].device_kind.lower()
    except Exception:
        return False
    return ("v6" in kind) or ("v7" in kind)


def _pick_tiles(N):
    """Pick p/q tiles that divide N (multiples of 128) or fall back to full N."""
    def _divisor(cands):
        for t in cands:
            if N % t == 0:
                return t
        return N
    p_tile = N if N <= 512 else _divisor((512, 384, 256, 128))
    q_tile = N if N <= 1024 else _divisor((1024, 512, 384, 256, 128))
    return p_tile, q_tile


def _vmem_estimate_bytes(C, p_tile, q_tile):
    f32 = 4
    blocks = 2 * f32 * (C * p_tile        # feature p-view (double-buffered)
                        + C * q_tile      # feature q-view
                        + q_tile * 128    # m column tile (lane-padded to 128)
                        + C * p_tile)     # output block
    scratch = 2 * f32 * C * p_tile        # num + den accumulators
    temps = q_tile * p_tile * (4 + 4 + 2)  # m broadcast + exp arg (f32) + e (bf16)
    return blocks + scratch + temps


def _psm_kernel(gamma_ref, mm_ref, fp_ref, fq_ref, mcol_ref, o_ref,
                num_ref, den_ref, *, C, bf16_exp):
    # gamma_ref : SMEM (1,)            gamma scalar
    # mm_ref    : SMEM (B, 2)          per-batch [max(m), min(m)]
    # fp_ref    : VMEM (1, C, p_tile)  feature p-slice (residual / analytic max)
    # fq_ref    : VMEM (1, C, q_tile)  feature q-slice (matmul LHS)
    # mcol_ref  : VMEM (1, q_tile, 1)  selected map channel, q on sublanes
    # o_ref     : VMEM (1, C, p_tile)  output block (resident across q)
    # num_ref/den_ref : VMEM (C, p_tile) f32 accumulators (persist across q steps)
    b = pl.program_id(0)
    q = pl.program_id(2)

    @pl.when(q == 0)
    def _init():
        num_ref[...] = jnp.zeros_like(num_ref)
        den_ref[...] = jnp.zeros_like(den_ref)

    m_max = mm_ref[b, 0]
    m_min = mm_ref[b, 1]

    feat_p = fp_ref[0]                     # (C, p_tile) f32
    m_tile = mcol_ref[0]                   # (q_tile, 1) f32
    q_tile = m_tile.shape[0]
    p_tile = feat_p.shape[1]

    # Exact per-row softmax max of the rank-1 energy (no reductions needed).
    mx_all = jnp.where(feat_p >= 0.0, feat_p * m_max, feat_p * m_min)   # (C, p_tile)

    # Lane-broadcast of the m column, hoisted out of the channel loop.
    m_b = jnp.broadcast_to(m_tile, (q_tile, p_tile))                    # (q_tile, p_tile)

    ones_row = jnp.ones((1, q_tile), jnp.float32)

    num_parts, den_parts = [], []
    # TODO(synk): for large C (hundreds of channels) turn this static unroll
    #             into a grid axis to avoid code / vreg-pressure blowup.
    for i in range(C):
        fi_p = feat_p[i:i + 1, :]                                        # (1, p_tile)
        mx = mx_all[i:i + 1, :]
        arg = m_b * fi_p - mx                                            # (q_tile, p_tile) f32, <= 0
        if bf16_exp:
            e = jnp.exp(arg.astype(jnp.bfloat16))        # bf16 EUP (v6e/v7x), bf16 MXU RHS
        else:
            e = jnp.exp(arg).astype(jnp.bfloat16)        # f32 EUP (v5e), bf16 MXU RHS
        # Fused numerator + denominator: one bf16 MXU matmul, f32 accumulation.
        lhs2 = jnp.concatenate([fq_ref[0, i:i + 1, :], ones_row], axis=0)   # (2, q_tile)
        part = jnp.dot(lhs2.astype(jnp.bfloat16), e,
                       preferred_element_type=jnp.float32)                  # (2, p_tile)
        num_parts.append(part[0:1, :])
        den_parts.append(part[1:2, :])

    num_ref[...] += jnp.concatenate(num_parts, axis=0)
    den_ref[...] += jnp.concatenate(den_parts, axis=0)

    @pl.when(q == pl.num_programs(2) - 1)
    def _finalize():
        gamma = gamma_ref[0]
        attn_out = num_ref[...] * pl.reciprocal(den_ref[...], approx=True)
        o_ref[0] = (gamma * attn_out + feat_p).astype(o_ref.dtype)


def psm_forward(feature, seg_map, gamma):
    """feature: (B, C, H, W) NCHW, seg_map: (B, M>=2, H, W), gamma: scalar."""
    B, C, H, W = feature.shape
    N = H * W
    f = feature.reshape(B, C, N).astype(jnp.float32)
    m = seg_map[:, 1, :, :].reshape(B, N).astype(jnp.float32)
    m_col = m.reshape(B, N, 1)                                         # q on sublanes
    mm = jnp.stack([jnp.max(m, axis=1), jnp.min(m, axis=1)], axis=1)   # (B, 2) scalars
    g = jnp.asarray(gamma, jnp.float32).reshape(1)

    p_tile, q_tile = _pick_tiles(N)
    n_p, n_q = N // p_tile, N // q_tile

    est = _vmem_estimate_bytes(C, p_tile, q_tile)
    if est > 30 * 1024 * 1024:
        raise ValueError(
            f"PSM Pallas kernel: tiles (p_tile={p_tile}, q_tile={q_tile}) need "
            f"~{est / 2**20:.1f} MiB VMEM (N={N} has no friendly tiling); "
            f"refusing to overflow scoped VMEM.")
    vmem_limit = int(min(max(2 * est + (4 << 20), 16 << 20), 32 << 20))

    bf16_exp = _bf16_exp_supported()
    kernel = functools.partial(_psm_kernel, C=C, bf16_exp=bf16_exp)

    out = pl.pallas_call(
        kernel,
        out_shape=jax.ShapeDtypeStruct((B, C, N), jnp.float32),
        grid=(B, n_p, n_q),
        in_specs=[
            pl.BlockSpec(memory_space=pltpu.MemorySpace.SMEM),            # gamma
            pl.BlockSpec(memory_space=pltpu.MemorySpace.SMEM),            # [max(m), min(m)]
            pl.BlockSpec((1, C, p_tile), lambda b, p, q: (b, 0, p)),      # feature p-view
            pl.BlockSpec((1, C, q_tile), lambda b, p, q: (b, 0, q)),      # feature q-view
            pl.BlockSpec((1, q_tile, 1), lambda b, p, q: (b, q, 0)),      # m column tile
        ],
        out_specs=pl.BlockSpec((1, C, p_tile), lambda b, p, q: (b, 0, p)),
        scratch_shapes=[
            pltpu.VMEM((C, p_tile), jnp.float32),   # numerator accumulator
            pltpu.VMEM((C, p_tile), jnp.float32),   # denominator accumulator
        ],
        compiler_params=pltpu.CompilerParams(
            dimension_semantics=("parallel", "parallel", "arbitrary"),
            vmem_limit_bytes=vmem_limit),
        cost_estimate=pl.CostEstimate(
            flops=4 * B * C * N * N,
            transcendentals=B * C * N * N,
            bytes_accessed=4 * B * N * (3 * C + 1)),
    )(g, mm, f, f, m_col)
    return out.reshape(B, C, H, W)


def psm_reference(feature, seg_map, gamma):
    """Pure-JAX transcription of the PyTorch forward (for verification)."""
    B, C, H, W = feature.shape
    N = H * W
    m = seg_map[:, 1, :, :].reshape(B, 1, N)
    outs = []
    for i in range(C):
        fc = feature[:, i, :, :].reshape(B, 1, N)
        q = jnp.transpose(fc, (0, 2, 1))                        # (B, N, 1)
        energy = jnp.matmul(q, m)                               # (B, N, N)
        attn = jax.nn.softmax(energy, axis=-1)
        out = jnp.matmul(fc, jnp.transpose(attn, (0, 2, 1)))    # (B, 1, N)
        outs.append(out.reshape(B, 1, H, W))
    fe = jnp.concatenate(outs, axis=1)
    return gamma * fe + feature


if __name__ == "__main__":
    key = jax.random.PRNGKey(0)
    k1, k2 = jax.random.split(key)

    B, C, H, W = 2, 4, 16, 16
    M = 2  # seg map has >= 2 channels (forward indexes channel 1)

    feature = jax.random.normal(k1, (B, C, H, W), dtype=jnp.float32)
    seg_map = jax.random.normal(k2, (B, M, H, W), dtype=jnp.float32)

    # Parameter init exactly as in PSM.__init__: gamma = zeros(1)
    gamma0 = jnp.zeros((1,), dtype=jnp.float32)

    out0 = psm_forward(feature, seg_map, gamma0[0])
    jax.block_until_ready(out0)
    ref0 = psm_reference(feature, seg_map, gamma0[0])
    # gamma = 0: result must equal the input feature exactly (residual / layout check).
    assert np.allclose(np.asarray(out0), np.asarray(ref0), atol=1e-5, rtol=1e-5), \
        "gamma=0 residual path mismatch"

    # Non-zero gamma exercises the attention path; tolerance covers bf16 exp + bf16 MXU.
    out1 = psm_forward(feature, seg_map, 0.5)
    ref1 = psm_reference(feature, seg_map, 0.5)
    jax.block_until_ready(out1)
    max_err = float(np.max(np.abs(np.asarray(out1) - np.asarray(ref1))))
    assert np.allclose(np.asarray(out1), np.asarray(ref1), atol=3e-2, rtol=3e-2), \
        f"attention path mismatch, max abs err={max_err}"

    print("KERNEL_OK")
</pallas_src>

<mosaic_0001>
module attributes {stable_mosaic.version = 11 : i64} {
  func.func @_psm_kernel(%arg0: i32, %arg1: i32, %arg2: i32, %arg3: memref<1xf32, #tpu.memory_space<smem>>, %arg4: memref<2x2xf32, #tpu.memory_space<smem>>, %arg5: memref<1x4x256xf32, #tpu.memory_space<vmem>>, %arg6: memref<1x4x256xf32, #tpu.memory_space<vmem>>, %arg7: memref<1x256x1xf32, #tpu.memory_space<vmem>>, %arg8: memref<1x4x256xf32, #tpu.memory_space<vmem>>, %arg9: memref<4x256xf32, #tpu.memory_space<vmem>>, %arg10: memref<4x256xf32, #tpu.memory_space<vmem>>) attributes {dimension_semantics = [#tpu.dimension_semantics<parallel>, #tpu.dimension_semantics<parallel>, #tpu.dimension_semantics<arbitrary>], iteration_bounds = array<i64: 2, 1, 1>, scalar_prefetch = 0 : i64, scratch_operands = 2 : i64, tpu.core_type = #tpu.core_type<tc>, window_params = [{transform_indices = @transform_0, window_bounds = array<i64: 1>}, {transform_indices = @transform_1, window_bounds = array<i64: 2, 2>}, {transform_indices = @transform_2, window_bounds = array<i64: 1, 4, 256>}, {transform_indices = @transform_3, window_bounds = array<i64: 1, 4, 256>}, {transform_indices = @transform_4, window_bounds = array<i64: 1, 256, 1>}, {transform_indices = @transform_5, window_bounds = array<i64: 1, 4, 256>}]} {
    %c0_i32 = arith.constant 0 : i32
    %0 = arith.cmpi eq, %arg2, %c0_i32 : i32
    %1 = arith.extui %0 : i1 to i32
    %c0_i32_0 = arith.constant 0 : i32
    %2 = arith.cmpi ne, %1, %c0_i32_0 : i32
    scf.if %2 {
      %cst_32 = arith.constant 0.000000e+00 : f32
      %92 = vector.broadcast %cst_32 : f32 to vector<4x256xf32>
      %c0_33 = arith.constant 0 : index
      %c0_34 = arith.constant 0 : index
      %93 = vector.load %arg9[%c0_33, %c0_34] : memref<4x256xf32, #tpu.memory_space<vmem>>, vector<4x256xf32>
      tpu.vector_store %arg9[%c0_33, %c0_34], %92 {strides = array<i32>} : memref<4x256xf32, #tpu.memory_space<vmem>>, vector<4x256xf32>,
      %cst_35 = arith.constant 0.000000e+00 : f32
      %94 = vector.broadcast %cst_35 : f32 to vector<4x256xf32>
      %c0_36 = arith.constant 0 : index
      %c0_37 = arith.constant 0 : index
      %95 = vector.load %arg10[%c0_36, %c0_37] : memref<4x256xf32, #tpu.memory_space<vmem>>, vector<4x256xf32>
      tpu.vector_store %arg10[%c0_36, %c0_37], %94 {strides = array<i32>} : memref<4x256xf32, #tpu.memory_space<vmem>>, vector<4x256xf32>,
    } else {
    }
    %3 = arith.index_cast %arg0 : i32 to index
    %c0 = arith.constant 0 : index
    %4 = memref.load %arg4[%3, %c0] : memref<2x2xf32, #tpu.memory_space<smem>>
    %5 = arith.index_cast %arg0 : i32 to index
    %c1 = arith.constant 1 : index
    %6 = memref.load %arg4[%5, %c1] : memref<2x2xf32, #tpu.memory_space<smem>>
    %c0_1 = arith.constant 0 : index
    %c0_2 = arith.constant 0 : index
    %c0_3 = arith.constant 0 : index
    %7 = vector.load %arg5[%c0_1, %c0_2, %c0_3] : memref<1x4x256xf32, #tpu.memory_space<vmem>>, vector<1x4x256xf32>
    %8 = vector.shape_cast %7 : vector<1x4x256xf32> to vector<4x256xf32>
    %c0_4 = arith.constant 0 : index
    %c0_5 = arith.constant 0 : index
    %c0_6 = arith.constant 0 : index
    %9 = vector.load %arg7[%c0_4, %c0_5, %c0_6] : memref<1x256x1xf32, #tpu.memory_space<vmem>>, vector<1x256x1xf32>
    %10 = vector.shape_cast %9 : vector<1x256x1xf32> to vector<256x1xf32>
    %cst = arith.constant 0.000000e+00 : f32
    %11 = vector.broadcast %cst : f32 to vector<4x256xf32>
    %12 = arith.cmpf oge, %8, %11 : vector<4x256xf32>
    %13 = vector.broadcast %4 : f32 to vector<4x256xf32>
    %14 = arith.mulf %8, %13 : vector<4x256xf32>
    %15 = vector.broadcast %6 : f32 to vector<4x256xf32>
    %16 = arith.mulf %8, %15 : vector<4x256xf32>
    %17 = arith.select %12, %14, %16 : vector<4x256xi1>, vector<4x256xf32>
    %18 = vector.shape_cast %10 : vector<256x1xf32> to vector<256x1xf32>
    %19 = vector.broadcast %18 : vector<256x1xf32> to vector<256x256xf32>
    %cst_7 = arith.constant 1.000000e+00 : f32
    %20 = vector.broadcast %cst_7 : f32 to vector<1x256xf32>
    %21 = vector.extract_strided_slice %8 {offsets = [0, 0], sizes = [1, 256], strides = [1, 1]} : vector<4x256xf32> to vector<1x256xf32>
    %22 = vector.extract_strided_slice %17 {offsets = [0, 0], sizes = [1, 256], strides = [1, 1]} : vector<4x256xf32> to vector<1x256xf32>
    %23 = vector.broadcast %21 : vector<1x256xf32> to vector<256x256xf32>
    %24 = arith.mulf %19, %23 : vector<256x256xf32>
    %25 = vector.broadcast %22 : vector<1x256xf32> to vector<256x256xf32>
    %26 = arith.subf %24, %25 : vector<256x256xf32>
    %27 = math.exp %26 : vector<256x256xf32>
    %28 = arith.truncf %27 : vector<256x256xf32> to vector<256x256xbf16>
    %c0_8 = arith.constant 0 : index
    %c0_9 = arith.constant 0 : index
    %c0_10 = arith.constant 0 : index
    %29 = vector.load %arg6[%c0_8, %c0_9, %c0_10] : memref<1x4x256xf32, #tpu.memory_space<vmem>>, vector<1x1x256xf32>
    %30 = vector.shape_cast %29 : vector<1x1x256xf32> to vector<1x256xf32>
    %31 = tpu.concatenate %30, %20 in 0 : vector<1x256xf32>, vector<1x256xf32> -> vector<2x256xf32>
    %32 = arith.truncf %31 : vector<2x256xf32> to vector<2x256xbf16>
    %cst_11 = arith.constant dense<0.000000e+00> : vector<2x256xf32>
    %33 = tpu.matmul %32, %28, %cst_11 {dimension_numbers = #tpu.dot_dimension_numbers<[1], [0], [0], [1], [0, 0, 1, 1], [], []>} : vector<2x256xbf16>, vector<256x256xbf16>, vector<2x256xf32> -> vector<2x256xf32>
    %34 = vector.extract_strided_slice %33 {offsets = [0, 0], sizes = [1, 256], strides = [1, 1]} : vector<2x256xf32> to vector<1x256xf32>
    %35 = vector.extract_strided_slice %33 {offsets = [1, 0], sizes = [1, 256], strides = [1, 1]} : vector<2x256xf32> to vector<1x256xf32>
    %36 = vector.extract_strided_slice %8 {offsets = [1, 0], sizes = [1, 256], strides = [1, 1]} : vector<4x256xf32> to vector<1x256xf32>
    %37 = vector.extract_strided_slice %17 {offsets = [1, 0], sizes = [1, 256], strides = [1, 1]} : vector<4x256xf32> to vector<1x256xf32>
    %38 = vector.broadcast %36 : vector<1x256xf32> to vector<256x256xf32>
    %39 = arith.mulf %19, %38 : vector<256x256xf32>
    %40 = vector.broadcast %37 : vector<1x256xf32> to vector<256x256xf32>
    %41 = arith.subf %39, %40 : vector<256x256xf32>
    %42 = math.exp %41 : vector<256x256xf32>
    %43 = arith.truncf %42 : vector<256x256xf32> to vector<256x256xbf16>
    %c0_12 = arith.constant 0 : index
    %c1_13 = arith.constant 1 : index
    %c0_14 = arith.constant 0 : index
    %44 = vector.load %arg6[%c0_12, %c1_13, %c0_14] : memref<1x4x256xf32, #tpu.memory_space<vmem>>, vector<1x1x256xf32>
    %45 = vector.shape_cast %44 : vector<1x1x256xf32> to vector<1x256xf32>
    %46 = tpu.concatenate %45, %20 in 0 : vector<1x256xf32>, vector<1x256xf32> -> vector<2x256xf32>
    %47 = arith.truncf %46 : vector<2x256xf32> to vector<2x256xbf16>
    %cst_15 = arith.constant dense<0.000000e+00> : vector<2x256xf32>
    %48 = tpu.matmul %47, %43, %cst_15 {dimension_numbers = #tpu.dot_dimension_numbers<[1], [0], [0], [1], [0, 0, 1, 1], [], []>} : vector<2x256xbf16>, vector<256x256xbf16>, vector<2x256xf32> -> vector<2x256xf32>
    %49 = vector.extract_strided_slice %48 {offsets = [0, 0], sizes = [1, 256], strides = [1, 1]} : vector<2x256xf32> to vector<1x256xf32>
    %50 = vector.extract_strided_slice %48 {offsets = [1, 0], sizes = [1, 256], strides = [1, 1]} : vector<2x256xf32> to vector<1x256xf32>
    %51 = vector.extract_strided_slice %8 {offsets = [2, 0], sizes = [1, 256], strides = [1, 1]} : vector<4x256xf32> to vector<1x256xf32>
    %52 = vector.extract_strided_slice %17 {offsets = [2, 0], sizes = [1, 256], strides = [1, 1]} : vector<4x256xf32> to vector<1x256xf32>
    %53 = vector.broadcast %51 : vector<1x256xf32> to vector<256x256xf32>
    %54 = arith.mulf %19, %53 : vector<256x256xf32>
    %55 = vector.broadcast %52 : vector<1x256xf32> to vector<256x256xf32>
    %56 = arith.subf %54, %55 : vector<256x256xf32>
    %57 = math.exp %56 : vector<256x256xf32>
    %58 = arith.truncf %57 : vector<256x256xf32> to vector<256x256xbf16>
    %c0_16 = arith.constant 0 : index
    %c2 = arith.constant 2 : index
    %c0_17 = arith.constant 0 : index
    %59 = vector.load %arg6[%c0_16, %c2, %c0_17] : memref<1x4x256xf32, #tpu.memory_space<vmem>>, vector<1x1x256xf32>
    %60 = vector.shape_cast %59 : vector<1x1x256xf32> to vector<1x256xf32>
    %61 = tpu.concatenate %60, %20 in 0 : vector<1x256xf32>, vector<1x256xf32> -> vector<2x256xf32>
    %62 = arith.truncf %61 : vector<2x256xf32> to vector<2x256xbf16>
    %cst_18 = arith.constant dense<0.000000e+00> : vector<2x256xf32>
    %63 = tpu.matmul %62, %58, %cst_18 {dimension_numbers = #tpu.dot_dimension_numbers<[1], [0], [0], [1], [0, 0, 1, 1], [], []>} : vector<2x256xbf16>, vector<256x256xbf16>, vector<2x256xf32> -> vector<2x256xf32>
    %64 = vector.extract_strided_slice %63 {offsets = [0, 0], sizes = [1, 256], strides = [1, 1]} : vector<2x256xf32> to vector<1x256xf32>
    %65 = vector.extract_strided_slice %63 {offsets = [1, 0], sizes = [1, 256], strides = [1, 1]} : vector<2x256xf32> to vector<1x256xf32>
    %66 = vector.extract_strided_slice %8 {offsets = [3, 0], sizes = [1, 256], strides = [1, 1]} : vector<4x256xf32> to vector<1x256xf32>
    %67 = vector.extract_strided_slice %17 {offsets = [3, 0], sizes = [1, 256], strides = [1, 1]} : vector<4x256xf32> to vector<1x256xf32>
    %68 = vector.broadcast %66 : vector<1x256xf32> to vector<256x256xf32>
    %69 = arith.mulf %19, %68 : vector<256x256xf32>
    %70 = vector.broadcast %67 : vector<1x256xf32> to vector<256x256xf32>
    %71 = arith.subf %69, %70 : vector<256x256xf32>
    %72 = math.exp %71 : vector<256x256xf32>
    %73 = arith.truncf %72 : vector<256x256xf32> to vector<256x256xbf16>
    %c0_19 = arith.constant 0 : index
    %c3 = arith.constant 3 : index
    %c0_20 = arith.constant 0 : index
    %74 = vector.load %arg6[%c0_19, %c3, %c0_20] : memref<1x4x256xf32, #tpu.memory_space<vmem>>, vector<1x1x256xf32>
    %75 = vector.shape_cast %74 : vector<1x1x256xf32> to vector<1x256xf32>
    %76 = tpu.concatenate %75, %20 in 0 : vector<1x256xf32>, vector<1x256xf32> -> vector<2x256xf32>
    %77 = arith.truncf %76 : vector<2x256xf32> to vector<2x256xbf16>
    %cst_21 = arith.constant dense<0.000000e+00> : vector<2x256xf32>
    %78 = tpu.matmul %77, %73, %cst_21 {dimension_numbers = #tpu.dot_dimension_numbers<[1], [0], [0], [1], [0, 0, 1, 1], [], []>} : vector<2x256xbf16>, vector<256x256xbf16>, vector<2x256xf32> -> vector<2x256xf32>
    %79 = vector.extract_strided_slice %78 {offsets = [0, 0], sizes = [1, 256], strides = [1, 1]} : vector<2x256xf32> to vector<1x256xf32>
    %80 = vector.extract_strided_slice %78 {offsets = [1, 0], sizes = [1, 256], strides = [1, 1]} : vector<2x256xf32> to vector<1x256xf32>
    %c0_22 = arith.constant 0 : index
    %c0_23 = arith.constant 0 : index
    %81 = vector.load %arg9[%c0_22, %c0_23] : memref<4x256xf32, #tpu.memory_space<vmem>>, vector<4x256xf32>
    %82 = tpu.concatenate %34, %49, %64, %79 in 0 : vector<1x256xf32>, vector<1x256xf32>, vector<1x256xf32>, vector<1x256xf32> -> vector<4x256xf32>
    %83 = arith.addf %81, %82 : vector<4x256xf32>
    %c0_24 = arith.constant 0 : index
    %c0_25 = arith.constant 0 : index
    %84 = vector.load %arg9[%c0_24, %c0_25] : memref<4x256xf32, #tpu.memory_space<vmem>>, vector<4x256xf32>
    tpu.vector_store %arg9[%c0_24, %c0_25], %83 {strides = array<i32>} : memref<4x256xf32, #tpu.memory_space<vmem>>, vector<4x256xf32>,
    %c0_26 = arith.constant 0 : index
    %c0_27 = arith.constant 0 : index
    %85 = vector.load %arg10[%c0_26, %c0_27] : memref<4x256xf32, #tpu.memory_space<vmem>>, vector<4x256xf32>
    %86 = tpu.concatenate %35, %50, %65, %80 in 0 : vector<1x256xf32>, vector<1x256xf32>, vector<1x256xf32>, vector<1x256xf32> -> vector<4x256xf32>
    %87 = arith.addf %85, %86 : vector<4x256xf32>
    %c0_28 = arith.constant 0 : index
    %c0_29 = arith.constant 0 : index
    %88 = vector.load %arg10[%c0_28, %c0_29] : memref<4x256xf32, #tpu.memory_space<vmem>>, vector<4x256xf32>
    tpu.vector_store %arg10[%c0_28, %c0_29], %87 {strides = array<i32>} : memref<4x256xf32, #tpu.memory_space<vmem>>, vector<4x256xf32>,
    %c0_i32_30 = arith.constant 0 : i32
    %89 = arith.cmpi eq, %arg2, %c0_i32_30 : i32
    %90 = arith.extui %89 : i1 to i32
    %c0_i32_31 = arith.constant 0 : i32
    %91 = arith.cmpi ne, %90, %c0_i32_31 : i32
    scf.if %91 {
      %c0_32 = arith.constant 0 : index
      %92 = memref.load %arg3[%c0_32] : memref<1xf32, #tpu.memory_space<smem>>
      %c0_33 = arith.constant 0 : index
      %c0_34 = arith.constant 0 : index
      %93 = vector.load %arg9[%c0_33, %c0_34] : memref<4x256xf32, #tpu.memory_space<vmem>>, vector<4x256xf32>
      %c0_35 = arith.constant 0 : index
      %c0_36 = arith.constant 0 : index
      %94 = vector.load %arg10[%c0_35, %c0_36] : memref<4x256xf32, #tpu.memory_space<vmem>>, vector<4x256xf32>
      %95 = tpu.reciprocal %94 {approx = true} : vector<4x256xf32> -> vector<4x256xf32>
      %96 = arith.mulf %93, %95 : vector<4x256xf32>
      %97 = vector.broadcast %92 : f32 to vector<4x256xf32>
      %98 = arith.mulf %97, %96 : vector<4x256xf32>
      %99 = arith.addf %98, %8 : vector<4x256xf32>
      %c0_37 = arith.constant 0 : index
      %c0_38 = arith.constant 0 : index
      %c0_39 = arith.constant 0 : index
      %100 = vector.load %arg8[%c0_37, %c0_38, %c0_39] : memref<1x4x256xf32, #tpu.memory_space<vmem>>, vector<1x4x256xf32>
      %101 = vector.shape_cast %100 : vector<1x4x256xf32> to vector<4x256xf32>
      %102 = vector.shape_cast %99 : vector<4x256xf32> to vector<1x4x256xf32>
      tpu.vector_store %arg8[%c0_37, %c0_38, %c0_39], %102 {strides = array<i32>} : memref<1x4x256xf32, #tpu.memory_space<vmem>>, vector<1x4x256xf32>,
    } else {
    }
    return
  }
  func.func @transform_0(%arg0: i32, %arg1: i32, %arg2: i32) -> i32 {
    %c0_i32 = arith.constant 0 : i32
    %c0_i32_0 = arith.constant 0 : i32
    return %c0_i32 : i32
  }
  func.func @transform_1(%arg0: i32, %arg1: i32, %arg2: i32) -> (i32, i32) {
    %c0_i32 = arith.constant 0 : i32
    %c0_i32_0 = arith.constant 0 : i32
    %c0_i32_1 = arith.constant 0 : i32
    return %c0_i32, %c0_i32_0 : i32, i32
  }
  func.func @transform_2(%arg0: i32, %arg1: i32, %arg2: i32) -> (i32, i32, i32) {
    %c0_i32 = arith.constant 0 : i32
    %c0_i32_0 = arith.constant 0 : i32
    return %arg0, %c0_i32, %arg1 : i32, i32, i32
  }
  func.func @transform_3(%arg0: i32, %arg1: i32, %arg2: i32) -> (i32, i32, i32) {
    %c0_i32 = arith.constant 0 : i32
    %c0_i32_0 = arith.constant 0 : i32
    return %arg0, %c0_i32, %arg2 : i32, i32, i32
  }
  func.func @transform_4(%arg0: i32, %arg1: i32, %arg2: i32) -> (i32, i32, i32) {
    %c0_i32 = arith.constant 0 : i32
    %c0_i32_0 = arith.constant 0 : i32
    return %arg0, %arg2, %c0_i32 : i32, i32, i32
  }
  func.func @transform_5(%arg0: i32, %arg1: i32, %arg2: i32) -> (i32, i32, i32) {
    %c0_i32 = arith.constant 0 : i32
    %c0_i32_0 = arith.constant 0 : i32
    return %arg0, %c0_i32, %arg1 : i32, i32, i32
  }
}

</mosaic_0001>

<llo_original>
// kernel: tpu_custom_call.1
$region0: #{tpu_custom_call.1}
  #allocation0 [shape = 'u32[]', space=smem, size = 0x4, offset = 0x4, fixed_abs, tag = 'smem constant byte address 0x4 - core index']
  #allocation1 [shape = 'u32[144,128]{1,0:T(1,128)}', space=vmem, size = 0x12000, scoped, tag = 'internal scratch']
  #allocation2 [shape = 'f32[4,256]{1,0:T(4,128)}', space=vmem, size = 0x1000, scoped, tag = 'scratch operand']
  #allocation3 [shape = 'f32[4,256]{1,0:T(4,128)}', space=vmem, size = 0x1000, scoped, tag = 'scratch operand']
  #allocation4 [shape = 'f32[1]{0:T(128)S(6)}', space=smem, size = 0x200, scoped, tag = 'scoped memory for tpu_custom_call.1']
  %s0 = inlined_call_operand.<no memory space> [shape: f32[1], index: 0, kind: input, shape index: {}]
  %s1 = inlined_call_operand.vmem [shape: f32[2,2], index: 1, kind: input, shape index: {}]
  %s2 = inlined_call_operand.vmem [shape: f32[2,4,256], index: 2, kind: input, shape index: {}]
  %s3 = inlined_call_operand.vmem [shape: f32[2,4,256], index: 3, kind: input, shape index: {}]
  %s4 = inlined_call_operand.vmem [shape: f32[2,256,1], index: 4, kind: input, shape index: {}]
  %s5 = inlined_call_operand.hbm [shape: f32[2,4,256], index: 5, kind: output, shape index: {}]
  %s6 = sld [smem:[#allocation0]]
  $region65: #{tpu_custom_call.1} parent=0
    _
  %s8 = ssub.s32 1, %s6
  %s9 = scalar_select 0, %s8, %s6
  %10 = sst [smem:[#allocation4]] %s0
  $region1: #{tpu_custom_call.1} parent=0
    #allocation5 [shape = 'u8[1024]{0}', space=smem, size = 0x400, scoped, tag = 'input window, operand 1, single buffered']
    #allocation6 [shape = 's32[2]{0}', space=sflag, size = 0x8, scoped, tag = 'scoped memory for tpu_custom_call.1']
    #allocation7 [shape = 's32[2]{0}', space=sflag, size = 0x8, scoped, tag = 'scoped memory for tpu_custom_call.1']
    #allocation8 [shape = 'u8[8192]{0}', space=vmem, size = 0x2000, scoped, tag = 'output window, operand 0']
    %11 = vsyncpa [#allocation7], 0
    %12 = vsyncpa [#allocation6], 0
    %s13 = scalar_lea.sflag [#allocation6], 1
    %14 = vsyncpa %s13, 0
    loop: start=0, step=1, limit=4
    $region2: #{tpu_custom_call.1} parent=1 // loop_pre_header
      _
    $region3: #{tpu_custom_call.1} parent=1 // loop_header
      %s16 = sphi 0, %s20
      %p17 = scmp.ge.s32.totalorder %s16, 4
      %s23 = sphi 0, %s42
      %s24 = sphi 0, %s38
      %s25 = sphi 0, %s34
      %s26 = sphi 0, %s23
      %s27 = sphi 0, %s24
      %s28 = sphi 0, %s25
      %s29 = sphi 0, %s26
      %s30 = sphi 0, %s27
      %s31 = sphi 0, %s28
      %s43 = sphi 0, %s43
      %s45 = sphi 0, %s43
      %s46 = sphi 0, %s45
      %s60 = sphi 0, %s46
      %s64 = sphi 0, %s64
      %s66 = sphi 0, %s64
      %s67 = sphi 0, %s66
      %s81 = sphi 0, %s67
      %s89 = sphi 0, %s91
      %s92 = sphi 0, %s89
      %s93 = sphi 0, %s92
      %s109 = sphi 0, %s93
      %s117 = sphi 0, %s119
      %s120 = sphi 0, %s117
      %s121 = sphi 0, %s120
      %s137 = sphi 0, %s121
      %s145 = sphi 0, %s147
      %s148 = sphi 0, %s145
      %s149 = sphi 0, %s148
      %s165 = sphi 0, %s149
      %s173 = sphi 0, %s175
      %s176 = sphi 0, %s173
      %s177 = sphi 0, %s176
      %s193 = sphi 0, %s177
    $region4: #{tpu_custom_call.1} parent=1 // loop_header_branch
      %19 = sbr.rel (%p17) target = $region8
    $region5: #{tpu_custom_call.1} parent=1 // loop_body
      %s21 = ssub.s32 %s16, 1
      %s22 = ssub.s32 %s16, 2
      %s32 = sadd.s32 1, %s25
      %p33 = scmp.ge.s32.totalorder %s32, 1
      %s34 = scalar_select %p33, 0, %s32
      %s35 = sadd.s32 1, %s24
      %s36 = scalar_select %p33, %s35, %s24
      %p37 = scmp.ge.s32.totalorder %s36, 1
      %s38 = scalar_select %p37, 0, %s36
      %s39 = sadd.s32 1, %s23
      %s40 = scalar_select %p37, %s39, %s23
      %p41 = scmp.ge.s32.totalorder %s40, 2
      %s42 = scalar_select %p41, 0, %s40
      %s44 = sadd.s32 %s43, 1
      %p47 = scmp.eq.s32.totalorder %s16, 1
      %p48 = scmp.ne.s32.totalorder %s43, %s45
      %p49 = scmp.eq.s32.totalorder %s16, 0
      %p50 = por %p48, %p49
      %p51 = scmp.ne.s32.totalorder %s43, %s45
      %p52 = scmp.eq.s32.totalorder %s21, 1
      %p53 = por %p51, %p52
      %p54 = scmp.ne.s32.totalorder %s45, %s46
      %p55 = scmp.eq.s32.totalorder %s21, 0
      %p56 = por %p54, %p55
      %p57 = scmp.ne.s32.totalorder %s45, %s46
      %p58 = scmp.eq.s32.totalorder %s22, 1
      %p59 = por %p57, %p58
      %p61 = scmp.ne.s32.totalorder %s46, %s60
      %p62 = scmp.eq.s32.totalorder %s22, 0
      %p63 = por %p61, %p62
      %s65 = sadd.s32 %s64, 1
      %p68 = scmp.eq.s32.totalorder %s16, 1
      %p69 = scmp.ne.s32.totalorder %s64, %s66
      %p70 = scmp.eq.s32.totalorder %s16, 0
      %p71 = por %p69, %p70
      %p72 = scmp.ne.s32.totalorder %s64, %s66
      %p73 = scmp.eq.s32.totalorder %s21, 1
      %p74 = por %p72, %p73
      %p75 = scmp.ne.s32.totalorder %s66, %s67
      %p76 = scmp.eq.s32.totalorder %s21, 0
      %p77 = por %p75, %p76
      %p78 = scmp.ne.s32.totalorder %s66, %s67
      %p79 = scmp.eq.s32.totalorder %s22, 1
      %p80 = por %p78, %p79
      %p82 = scmp.ne.s32.totalorder %s67, %s81
      %p83 = scmp.eq.s32.totalorder %s22, 0
      %p84 = por %p82, %p83
      %s85 = ssub.s32 %s23, %s42
      %s86 = ssub.s32 %s24, %s38
      %s87 = sor.u32 %s85, %s86
      %p88 = scmp.eq.s32.totalorder %s87, 0
      %s90 = sadd.s32 %s89, 1
      %s91 = scalar_select %p88, %s89, %s90
      %p94 = pneg %p88
      %p95 = scmp.eq.s32.totalorder %s16, 1
      %p96 = por %p94, %p95
      %p97 = scmp.ne.s32.totalorder %s89, %s92
      %p98 = scmp.eq.s32.totalorder %s16, 0
      %p99 = por %p97, %p98
      %p100 = scmp.ne.s32.totalorder %s89, %s92
      %p101 = scmp.eq.s32.totalorder %s21, 1
      %p102 = por %p100, %p101
      %p103 = scmp.ne.s32.totalorder %s92, %s93
      %p104 = scmp.eq.s32.totalorder %s21, 0
      %p105 = por %p103, %p104
      %p106 = scmp.ne.s32.totalorder %s92, %s93
      %p107 = scmp.eq.s32.totalorder %s22, 1
      %p108 = por %p106, %p107
      %p110 = scmp.ne.s32.totalorder %s93, %s109
      %p111 = scmp.eq.s32.totalorder %s22, 0
      %p112 = por %p110, %p111
      %s113 = ssub.s32 %s23, %s42
      %s114 = ssub.s32 %s25, %s34
      %s115 = sor.u32 %s113, %s114
      %p116 = scmp.eq.s32.totalorder %s115, 0
      %s118 = sadd.s32 %s117, 1
      %s119 = scalar_select %p116, %s117, %s118
      %p122 = pneg %p116
      %p123 = scmp.eq.s32.totalorder %s16, 1
      %p124 = por %p122, %p123
      %p125 = scmp.ne.s32.totalorder %s117, %s120
      %p126 = scmp.eq.s32.totalorder %s16, 0
      %p127 = por %p125, %p126
      %p128 = scmp.ne.s32.totalorder %s117, %s120
      %p129 = scmp.eq.s32.totalorder %s21, 1
      %p130 = por %p128, %p129
      %p131 = scmp.ne.s32.totalorder %s120, %s121
      %p132 = scmp.eq.s32.totalorder %s21, 0
      %p133 = por %p131, %p132
      %p134 = scmp.ne.s32.totalorder %s120, %s121
      %p135 = scmp.eq.s32.totalorder %s22, 1
      %p136 = por %p134, %p135
      %p138 = scmp.ne.s32.totalorder %s121, %s137
      %p139 = scmp.eq.s32.totalorder %s22, 0
      %p140 = por %p138, %p139
      %s141 = ssub.s32 %s23, %s42
      %s142 = ssub.s32 %s25, %s34
      %s143 = sor.u32 %s141, %s142
      %p144 = scmp.eq.s32.totalorder %s143, 0
      %s146 = sadd.s32 %s145, 1
      %s147 = scalar_select %p144, %s145, %s146
      %p150 = pneg %p144
      %p151 = scmp.eq.s32.totalorder %s16, 1
      %p152 = por %p150, %p151
      %p153 = scmp.ne.s32.totalorder %s145, %s148
      %p154 = scmp.eq.s32.totalorder %s16, 0
      %p155 = por %p153, %p154
      %p156 = scmp.ne.s32.totalorder %s145, %s148
      %p157 = scmp.eq.s32.totalorder %s21, 1
      %p158 = por %p156, %p157
      %p159 = scmp.ne.s32.totalorder %s148, %s149
      %p160 = scmp.eq.s32.totalorder %s21, 0
      %p161 = por %p159, %p160
      %p162 = scmp.ne.s32.totalorder %s148, %s149
      %p163 = scmp.eq.s32.totalorder %s22, 1
      %p164 = por %p162, %p163
      %p166 = scmp.ne.s32.totalorder %s149, %s165
      %p167 = scmp.eq.s32.totalorder %s22, 0
      %p168 = por %p166, %p167
      %s169 = ssub.s32 %s23, %s42
      %s170 = ssub.s32 %s24, %s38
      %s171 = sor.u32 %s169, %s170
      %p172 = scmp.eq.s32.totalorder %s171, 0
      %s174 = sadd.s32 %s173, 1
      %s175 = scalar_select %p172, %s173, %s174
      %p178 = pneg %p172
      %p179 = scmp.eq.s32.totalorder %s16, 1
      %p180 = por %p178, %p179
      %p181 = scmp.ne.s32.totalorder %s173, %s176
      %p182 = scmp.eq.s32.totalorder %s16, 0
      %p183 = por %p181, %p182
      %p184 = scmp.ne.s32.totalorder %s173, %s176
      %p185 = scmp.eq.s32.totalorder %s21, 1
      %p186 = por %p184, %p185
      %p187 = scmp.ne.s32.totalorder %s176, %s177
      %p188 = scmp.eq.s32.totalorder %s21, 0
      %p189 = por %p187, %p188
      %p190 = scmp.ne.s32.totalorder %s176, %s177
      %p191 = scmp.eq.s32.totalorder %s22, 1
      %p192 = por %p190, %p191
      %p194 = scmp.ne.s32.totalorder %s177, %s193
      %p195 = scmp.eq.s32.totalorder %s22, 0
      %p196 = por %p194, %p195
      %p197 = scmp.le.s32.totalorder 1, %s16
      %p198 = scmp.lt.s32.totalorder %s16, 3
      %p199 = pnand %p197, %p198
      %p200 = pneg %p199
      // Predicated region
      $region9: #{tpu_custom_call.1} parent=5 // pred_check
        _
      $region10: #{tpu_custom_call.1} parent=5 // pred_check_branch
        %202 = sbr.rel (%p199) target = $region12
      $region11: #{tpu_custom_call.1} parent=5 // pred_region
        %s203 = ssub.s32 %s16, 1
        // Predicated region
        $region13: #{tpu_custom_call.1} parent=11 // pred_check
          %p204 = pneg %p56
        $region14: #{tpu_custom_call.1} parent=11 // pred_check_branch
          %206 = sbr.rel (%p204) target = $region16
        $region15: #{tpu_custom_call.1} parent=11 // pred_region
          _
        $region16: #{tpu_custom_call.1} parent=11 // pred_fallthru
          _
        // Predicated region
        $region17: #{tpu_custom_call.1} parent=11 // pred_check
          %p207 = pneg %p77
        $region18: #{tpu_custom_call.1} parent=11 // pred_check_branch
          %209 = sbr.rel (%p207) target = $region20
        $region19: #{tpu_custom_call.1} parent=11 // pred_region
          %s211 = ssub.s32 32, 32
          %212 = vsyncadd [#allocation7], %s211
          %s214 = sshll.u32 %s1, 4
          %s215 = int_to_ptr.vmem [resolvable:$true] %s214
          %217 = dma.vmem_to_smem %s215, 32, [#allocation5], [#allocation7]
        $region20: #{tpu_custom_call.1} parent=11 // pred_fallthru
          _
      $region12: #{tpu_custom_call.1} parent=5 // pred_fallthru
        _
      %p218 = scmp.lt.s32.totalorder %s16, 2
      // Predicated region
      $region21: #{tpu_custom_call.1} parent=5 // pred_check
        %p219 = pneg %p218
      $region22: #{tpu_custom_call.1} parent=5 // pred_check_branch
        %221 = sbr.rel (%p219) target = $region24
      $region23: #{tpu_custom_call.1} parent=5 // pred_region
        // Predicated region
        $region25: #{tpu_custom_call.1} parent=23 // pred_check
          %p222 = pneg %p99
        $region26: #{tpu_custom_call.1} parent=23 // pred_check_branch
          %224 = sbr.rel (%p222) target = $region28
        $region27: #{tpu_custom_call.1} parent=23 // pred_region
          %s225 = smul.u32 2, %s24
          %p226 = scmp.lt.s32.totalorder %s23, 1
          %s227 = scalar_select %p226, %s23, 1
          %p228 = scmp.lt.s32.totalorder %s225, 1
          %s229 = scalar_select %p228, %s225, 1
          %s230 = smul.addr %s227, 2
          %s231 = sadd.s32 %s229, %s230
          %s232 = smul.addr %s231, 4
          %s233 = scalar_lea.vmem %s2, %s232
          %s234 = smul.u32 2, %s24
        $region28: #{tpu_custom_call.1} parent=23 // pred_fallthru
          _
        // Predicated region
        $region29: #{tpu_custom_call.1} parent=23 // pred_check
          %p235 = pneg %p127
        $region30: #{tpu_custom_call.1} parent=23 // pred_check_branch
          %237 = sbr.rel (%p235) target = $region32
        $region31: #{tpu_custom_call.1} parent=23 // pred_region
          %s238 = smul.u32 2, %s25
          %p239 = scmp.lt.s32.totalorder %s23, 1
          %s240 = scalar_select %p239, %s23, 1
          %p241 = scmp.lt.s32.totalorder %s238, 1
          %s242 = scalar_select %p241, %s238, 1
          %s243 = smul.addr %s240, 2
          %s244 = sadd.s32 %s242, %s243
          %s245 = smul.addr %s244, 4
          %s246 = scalar_lea.vmem %s3, %s245
          %s247 = smul.u32 2, %s25
        $region32: #{tpu_custom_call.1} parent=23 // pred_fallthru
          _
        // Predicated region
        $region33: #{tpu_custom_call.1} parent=23 // pred_check
          %p248 = pneg %p155
        $region34: #{tpu_custom_call.1} parent=23 // pred_check_branch
          %250 = sbr.rel (%p248) target = $region36
        $region35: #{tpu_custom_call.1} parent=23 // pred_region
          %s251 = smul.u32 32, %s25
          %p252 = scmp.lt.s32.totalorder %s23, 1
          %s253 = scalar_select %p252, %s23, 1
          %p254 = scmp.lt.s32.totalorder %s251, 31
          %s255 = scalar_select %p254, %s251, 31
          %s256 = smul.addr %s253, 32
          %s257 = sadd.s32 %s255, %s256
          %s258 = smul.addr %s257, 8
          %s259 = scalar_lea.vmem %s4, %s258
          %s260 = smul.u32 32, %s25
        $region36: #{tpu_custom_call.1} parent=23 // pred_fallthru
          _
      $region24: #{tpu_custom_call.1} parent=5 // pred_fallthru
        _
      %p261 = scmp.le.s32.totalorder 1, %s16
      %p262 = scmp.lt.s32.totalorder %s16, 3
      %p263 = pnand %p261, %p262
      %p264 = pneg %p263
      // Predicated region
      $region37: #{tpu_custom_call.1} parent=5 // pred_check
        _
      $region38: #{tpu_custom_call.1} parent=5 // pred_check_branch
        %266 = sbr.rel (%p263) target = $region40
      $region39: #{tpu_custom_call.1} parent=5 // pred_region
        %s267 = ssub.s32 %s16, 1
        // Predicated region
        $region41: #{tpu_custom_call.1} parent=39 // pred_check
          %p268 = pneg %p77
        $region42: #{tpu_custom_call.1} parent=39 // pred_check_branch
          %270 = sbr.rel (%p268) target = $region44
        $region43: #{tpu_custom_call.1} parent=39 // pred_region
          %271 = dma.done [#allocation7], 32
        $region44: #{tpu_custom_call.1} parent=39 // pred_fallthru
          _
        %272 = sfence
        %p273 = pneg %p56
        %p274 = pneg %p53
        %p275 = pneg %p77
        %p276 = pneg %p74
        %s277 = smul.u32 2, %s27
        %p278 = scmp.lt.s32.totalorder %s26, 1
        %s279 = scalar_select %p278, %s26, 1
        %p280 = scmp.lt.s32.totalorder %s277, 1
        %s281 = scalar_select %p280, %s277, 1
        %s282 = smul.addr %s279, 2
        %s283 = sadd.s32 %s281, %s282
        %s284 = smul.addr %s283, 4
        %s285 = scalar_lea.vmem %s2, %s284
        %p286 = pneg %p105
        %p287 = pneg %p102
        %s288 = smul.u32 2, %s28
        %p289 = scmp.lt.s32.totalorder %s26, 1
        %s290 = scalar_select %p289, %s26, 1
        %p291 = scmp.lt.s32.totalorder %s288, 1
        %s292 = scalar_select %p291, %s288, 1
        %s293 = smul.addr %s290, 2
        %s294 = sadd.s32 %s292, %s293
        %s295 = smul.addr %s294, 4
        %s296 = scalar_lea.vmem %s3, %s295
        %p297 = pneg %p133
        %p298 = pneg %p130
        %s299 = smul.u32 32, %s28
        %p300 = scmp.lt.s32.totalorder %s26, 1
        %s301 = scalar_select %p300, %s26, 1
        %p302 = scmp.lt.s32.totalorder %s299, 31
        %s303 = scalar_select %p302, %s299, 31
        %s304 = smul.addr %s301, 32
        %s305 = sadd.s32 %s303, %s304
        %s306 = smul.addr %s305, 8
        %s307 = scalar_lea.vmem %s4, %s306
        %p308 = pneg %p161
        %p309 = pneg %p158
        %p310 = pneg %p189
        %p311 = pneg %p186
        %s312 = sand.u32 %s176, 1
        %s313 = scalar_lea.sflag [#allocation6], %s312
        %s314 = sand.u32 %s176, 1
        %s315 = smul.addr %s314, 8
        %s316 = scalar_lea.vmem [#allocation8], %s315
        %s317 = smul.u32 2, %s27
        %p318 = scmp.lt.s32.totalorder %s26, 1
        %s319 = scalar_select %p318, %s26, 1
        %p320 = scmp.lt.s32.totalorder %s317, 1
        %s321 = scalar_select %p320, %s317, 1
        %s322 = smul.addr %s319, 2
        %s323 = sadd.s32 %s321, %s322
        %s324 = smul.addr %s323, 4
        %s325 = scalar_lea.vmem %s2, %s324
        %s326 = smul.u32 2, %s27
        %s327 = smul.u32 2, %s28
        %p328 = scmp.lt.s32.totalorder %s26, 1
        %s329 = scalar_select %p328, %s26, 1
        %p330 = scmp.lt.s32.totalorder %s327, 1
        %s331 = scalar_select %p330, %s327, 1
        %s332 = smul.addr %s329, 2
        %s333 = sadd.s32 %s331, %s332
        %s334 = smul.addr %s333, 4
        %s335 = scalar_lea.vmem %s3, %s334
        %s336 = smul.u32 2, %s28
        %s337 = smul.u32 32, %s28
        %p338 = scmp.lt.s32.totalorder %s26, 1
        %s339 = scalar_select %p338, %s26, 1
        %p340 = scmp.lt.s32.totalorder %s337, 31
        %s341 = scalar_select %p340, %s337, 31
        %s342 = smul.addr %s339, 32
        %s343 = sadd.s32 %s341, %s342
        %s344 = smul.addr %s343, 8
        %s345 = scalar_lea.vmem %s4, %s344
        %s346 = smul.u32 32, %s28
        %s347 = smul.u32 2, %s27
        %p348 = scmp.eq.s32.totalorder %s28, 0
        // Predicated region
        $region45: #{tpu_custom_call.1} parent=39 // pred_check
          %p349 = pneg %p348
        $region46: #{tpu_custom_call.1} parent=39 // pred_check_branch
          %351 = sbr.rel (%p349) target = $region48
        $region47: #{tpu_custom_call.1} parent=39 // pred_region
          %352 = vst [vmem:[#allocation2] sm:$0xff] 0.0
          %353 = vst [vmem:[#allocation3] sm:$0xff] 0.0
        $region48: #{tpu_custom_call.1} parent=39 // pred_fallthru
          _
        %s354 = smul.u32 %s26, 128
        %s355 = sld [smem:[#allocation5 + %s354]]
        %s356 = sadd.s32 %s354, 1
        %s357 = sld [smem:[#allocation5 + %s356]]
        %v358 = vld [vmem:[%s325] sm:$0xff]
        %v359 = vld [vmem:[%s345] sm:$0xff]
        %v360 = vld [vmem:[%s345 + $0x8] sm:$0xff]
        %v361 = vld [vmem:[%s345 + $0x10] sm:$0xff]
        %v362 = vld [vmem:[%s345 + $0x18] sm:$0xff]
        %v363 = vld [vmem:[%s345 + $0x20] sm:$0xff]
        %v364 = vld [vmem:[%s345 + $0x28] sm:$0xff]
        %v365 = vld [vmem:[%s345 + $0x30] sm:$0xff]
        %v366 = vld [vmem:[%s345 + $0x38] sm:$0xff]
        %v367 = vld [vmem:[%s345 + $0x40] sm:$0xff]
        %v368 = vld [vmem:[%s345 + $0x48] sm:$0xff]
        %v369 = vld [vmem:[%s345 + $0x50] sm:$0xff]
        %v370 = vld [vmem:[%s345 + $0x58] sm:$0xff]
        %v371 = vld [vmem:[%s345 + $0x60] sm:$0xff]
        %v372 = vld [vmem:[%s345 + $0x68] sm:$0xff]
        %v373 = vld [vmem:[%s345 + $0x70] sm:$0xff]
        %v374 = vld [vmem:[%s345 + $0x78] sm:$0xff]
        %v375 = vld [vmem:[%s345 + $0x80] sm:$0xff]
        %v376 = vld [vmem:[%s345 + $0x88] sm:$0xff]
        %v377 = vld [vmem:[%s345 + $0x90] sm:$0xff]
        %v378 = vld [vmem:[%s345 + $0x98] sm:$0xff]
        %v379 = vld [vmem:[%s345 + $0xa0] sm:$0xff]
        %v380 = vld [vmem:[%s345 + $0xa8] sm:$0xff]
        %v381 = vld [vmem:[%s345 + $0xb0] sm:$0xff]
        %v382 = vld [vmem:[%s345 + $0xb8] sm:$0xff]
        %v383 = vld [vmem:[%s345 + $0xc0] sm:$0xff]
        %v384 = vld [vmem:[%s345 + $0xc8] sm:$0xff]
        %v385 = vld [vmem:[%s345 + $0xd0] sm:$0xff]
        %v386 = vld [vmem:[%s345 + $0xd8] sm:$0xff]
        %v387 = vld [vmem:[%s345 + $0xe0] sm:$0xff]
        %v388 = vld [vmem:[%s345 + $0xe8] sm:$0xff]
        %v389 = vld [vmem:[%s345 + $0xf0] sm:$0xff]
        %v390 = vld [vmem:[%s345 + $0xf8] sm:$0xff]
        %vm391 = vcmp.ge.f32.partialorder %v358, 0.0
        %v392 = vstv %s355
        %v393 = vmul.f32 %v358, %v392
        %v394 = vstv %s357
        %v395 = vmul.f32 %v358, %v394
        %v396 = vsel %vm391, %v393, %v395
        %398 = vset.pattern.permute.xlu0 0
        %399 = vperm.xlu0 %398, %v359
        %v400 = vpop.permute.xlu0 %399
        %403 = vset.pattern.permute.xlu0 0
        %404 = vperm.xlu0 %403, %v360
        %v405 = vpop.permute.xlu0 %404
        %408 = vset.pattern.permute.xlu0 0
        %409 = vperm.xlu0 %408, %v361
        %v410 = vpop.permute.xlu0 %409
        %413 = vset.pattern.permute.xlu0 0
        %414 = vperm.xlu0 %413, %v362
        %v415 = vpop.permute.xlu0 %414
        %418 = vset.pattern.permute.xlu0 0
        %419 = vperm.xlu0 %418, %v363
        %v420 = vpop.permute.xlu0 %419
        %423 = vset.pattern.permute.xlu0 0
        %424 = vperm.xlu0 %423, %v364
        %v425 = vpop.permute.xlu0 %424
        %428 = vset.pattern.permute.xlu0 0
        %429 = vperm.xlu0 %428, %v365
        %v430 = vpop.permute.xlu0 %429
        %433 = vset.pattern.permute.xlu0 0
        %434 = vperm.xlu0 %433, %v366
        %v435 = vpop.permute.xlu0 %434
        %438 = vset.pattern.permute.xlu0 0
        %439 = vperm.xlu0 %438, %v367
        %v440 = vpop.permute.xlu0 %439
        %443 = vset.pattern.permute.xlu0 0
        %444 = vperm.xlu0 %443, %v368
        %v445 = vpop.permute.xlu0 %444
        %448 = vset.pattern.permute.xlu0 0
        %449 = vperm.xlu0 %448, %v369
        %v450 = vpop.permute.xlu0 %449
        %453 = vset.pattern.permute.xlu0 0
        %454 = vperm.xlu0 %453, %v370
        %v455 = vpop.permute.xlu0 %454
        %458 = vset.pattern.permute.xlu0 0
        %459 = vperm.xlu0 %458, %v371
        %v460 = vpop.permute.xlu0 %459
        %463 = vset.pattern.permute.xlu0 0
        %464 = vperm.xlu0 %463, %v372
        %v465 = vpop.permute.xlu0 %464
        %468 = vset.pattern.permute.xlu0 0
        %469 = vperm.xlu0 %468, %v373
        %v470 = vpop.permute.xlu0 %469
        %473 = vset.pattern.permute.xlu0 0
        %474 = vperm.xlu0 %473, %v374
        %v475 = vpop.permute.xlu0 %474
        %478 = vset.pattern.permute.xlu0 0
        %479 = vperm.xlu0 %478, %v375
        %v480 = vpop.permute.xlu0 %479
        %483 = vset.pattern.permute.xlu0 0
        %484 = vperm.xlu0 %483, %v376
        %v485 = vpop.permute.xlu0 %484
        %488 = vset.pattern.permute.xlu0 0
        %489 = vperm.xlu0 %488, %v377
        %v490 = vpop.permute.xlu0 %489
        %493 = vset.pattern.permute.xlu0 0
        %494 = vperm.xlu0 %493, %v378
        %v495 = vpop.permute.xlu0 %494
        %498 = vset.pattern.permute.xlu0 0
        %499 = vperm.xlu0 %498, %v379
        %v500 = vpop.permute.xlu0 %499
        %503 = vset.pattern.permute.xlu0 0
        %504 = vperm.xlu0 %503, %v380
        %v505 = vpop.permute.xlu0 %504
        %508 = vset.pattern.permute.xlu0 0
        %509 = vperm.xlu0 %508, %v381
        %v510 = vpop.permute.xlu0 %509
        %513 = vset.pattern.permute.xlu0 0
        %514 = vperm.xlu0 %513, %v382
        %v515 = vpop.permute.xlu0 %514
        %518 = vset.pattern.permute.xlu0 0
        %519 = vperm.xlu0 %518, %v383
        %v520 = vpop.permute.xlu0 %519
        %523 = vset.pattern.permute.xlu0 0
        %524 = vperm.xlu0 %523, %v384
        %v525 = vpop.permute.xlu0 %524
        %528 = vset.pattern.permute.xlu0 0
        %529 = vperm.xlu0 %528, %v385
        %v530 = vpop.permute.xlu0 %529
        %533 = vset.pattern.permute.xlu0 0
        %534 = vperm.xlu0 %533, %v386
        %v535 = vpop.permute.xlu0 %534
        %538 = vset.pattern.permute.xlu0 0
        %539 = vperm.xlu0 %538, %v387
        %v540 = vpop.permute.xlu0 %539
        %543 = vset.pattern.permute.xlu0 0
        %544 = vperm.xlu0 %543, %v388
        %v545 = vpop.permute.xlu0 %544
        %548 = vset.pattern.permute.xlu0 0
        %549 = vperm.xlu0 %548, %v389
        %v550 = vpop.permute.xlu0 %549
        %553 = vset.pattern.permute.xlu0 0
        %554 = vperm.xlu0 %553, %v390
        %v555 = vpop.permute.xlu0 %554
        %v558 = vlaneseq
        %v559 = vshrl.u32 %v558, 7
        %v560 = vsub.s32 0, %v559
        %v561 = vrot.slane %v358, %v560
        %v562 = vlaneseq
        %v563 = vshrl.u32 %v562, 7
        %v564 = vsub.s32 4, %v563
        %v565 = vrot.slane %v358, %v564
        %v568 = vlaneseq
        %v569 = vshrl.u32 %v568, 7
        %v570 = vsub.s32 0, %v569
        %v571 = vrot.slane %v561, %v570
        %v572 = vlaneseq
        %v573 = vshrl.u32 %v572, 7
        %v574 = vsub.s32 0, %v573
        %v575 = vrot.slane %v565, %v574
        %v576 = vmul.f32 %v400, %v571
        %v577 = vmul.f32 %v400, %v575
        %v578 = vmul.f32 %v405, %v571
        %v579 = vmul.f32 %v405, %v575
        %v580 = vmul.f32 %v410, %v571
        %v581 = vmul.f32 %v410, %v575
        %v582 = vmul.f32 %v415, %v571
        %v583 = vmul.f32 %v415, %v575
        %v584 = vmul.f32 %v420, %v571
        %v585 = vmul.f32 %v420, %v575
        %v586 = vmul.f32 %v425, %v571
        %v587 = vmul.f32 %v425, %v575
        %v588 = vmul.f32 %v430, %v571
        %v589 = vmul.f32 %v430, %v575
        %v590 = vmul.f32 %v435, %v571
        %v591 = vmul.f32 %v435, %v575
        %v592 = vmul.f32 %v440, %v571
        %v593 = vmul.f32 %v440, %v575
        %v594 = vmul.f32 %v445, %v571
        %v595 = vmul.f32 %v445, %v575
        %v596 = vmul.f32 %v450, %v571
        %v597 = vmul.f32 %v450, %v575
        %v598 = vmul.f32 %v455, %v571
        %v599 = vmul.f32 %v455, %v575
        %v600 = vmul.f32 %v460, %v571
        %v601 = vmul.f32 %v460, %v575
        %v602 = vmul.f32 %v465, %v571
        %v603 = vmul.f32 %v465, %v575
        %v604 = vmul.f32 %v470, %v571
        %v605 = vmul.f32 %v470, %v575
        %v606 = vmul.f32 %v475, %v571
        %v607 = vmul.f32 %v475, %v575
        %v608 = vmul.f32 %v480, %v571
        %v609 = vmul.f32 %v480, %v575
        %v610 = vmul.f32 %v485, %v571
        %v611 = vmul.f32 %v485, %v575
        %v612 = vmul.f32 %v490, %v571
        %v613 = vmul.f32 %v490, %v575
        %v614 = vmul.f32 %v495, %v571
        %v615 = vmul.f32 %v495, %v575
        %v616 = vmul.f32 %v500, %v571
        %v617 = vmul.f32 %v500, %v575
        %v618 = vmul.f32 %v505, %v571
        %v619 = vmul.f32 %v505, %v575
        %v620 = vmul.f32 %v510, %v571
        %v621 = vmul.f32 %v510, %v575
        %v622 = vmul.f32 %v515, %v571
        %v623 = vmul.f32 %v515, %v575
        %v624 = vmul.f32 %v520, %v571
        %v625 = vmul.f32 %v520, %v575
        %v626 = vmul.f32 %v525, %v571
        %v627 = vmul.f32 %v525, %v575
        %v628 = vmul.f32 %v530, %v571
        %v629 = vmul.f32 %v530, %v575
        %v630 = vmul.f32 %v535, %v571
        %v631 = vmul.f32 %v535, %v575
        %v632 = vmul.f32 %v540, %v571
        %v633 = vmul.f32 %v540, %v575
        %v634 = vmul.f32 %v545, %v571
        %v635 = vmul.f32 %v545, %v575
        %v636 = vmul.f32 %v550, %v571
        %v637 = vmul.f32 %v550, %v575
        %v638 = vmul.f32 %v555, %v571
        %v639 = vmul.f32 %v555, %v575
        %v641 = vlaneseq
        %v642 = vshrl.u32 %v641, 7
        %v643 = vsub.s32 0, %v642
        %v644 = vrot.slane %v396, %v643
        %v645 = vlaneseq
        %v646 = vshrl.u32 %v645, 7
        %v647 = vsub.s32 4, %v646
        %v648 = vrot.slane %v396, %v647
        %v651 = vlaneseq
        %v652 = vshrl.u32 %v651, 7
        %v653 = vsub.s32 0, %v652
        %v654 = vrot.slane %v644, %v653
        %v655 = vlaneseq
        %v656 = vshrl.u32 %v655, 7
        %v657 = vsub.s32 0, %v656
        %v658 = vrot.slane %v648, %v657
        %v659 = vsub.f32 %v576, %v654
        %v660 = vsub.f32 %v577, %v658
        %v661 = vsub.f32 %v578, %v654
        %v662 = vsub.f32 %v579, %v658
        %v663 = vsub.f32 %v580, %v654
        %v664 = vsub.f32 %v581, %v658
        %v665 = vsub.f32 %v582, %v654
        %v666 = vsub.f32 %v583, %v658
        %v667 = vsub.f32 %v584, %v654
        %v668 = vsub.f32 %v585, %v658
        %v669 = vsub.f32 %v586, %v654
        %v670 = vsub.f32 %v587, %v658
        %v671 = vsub.f32 %v588, %v654
        %v672 = vsub.f32 %v589, %v658
        %v673 = vsub.f32 %v590, %v654
        %v674 = vsub.f32 %v591, %v658
        %v675 = vsub.f32 %v592, %v654
        %v676 = vsub.f32 %v593, %v658
        %v677 = vsub.f32 %v594, %v654
        %v678 = vsub.f32 %v595, %v658
        %v679 = vsub.f32 %v596, %v654
        %v680 = vsub.f32 %v597, %v658
        %v681 = vsub.f32 %v598, %v654
        %v682 = vsub.f32 %v599, %v658
        %v683 = vsub.f32 %v600, %v654
        %v684 = vsub.f32 %v601, %v658
        %v685 = vsub.f32 %v602, %v654
        %v686 = vsub.f32 %v603, %v658
        %v687 = vsub.f32 %v604, %v654
        %v688 = vsub.f32 %v605, %v658
        %v689 = vsub.f32 %v606, %v654
        %v690 = vsub.f32 %v607, %v658
        %v691 = vsub.f32 %v608, %v654
        %v692 = vsub.f32 %v609, %v658
        %v693 = vsub.f32 %v610, %v654
        %v694 = vsub.f32 %v611, %v658
        %v695 = vsub.f32 %v612, %v654
        %v696 = vsub.f32 %v613, %v658
        %v697 = vsub.f32 %v614, %v654
        %v698 = vsub.f32 %v615, %v658
        %v699 = vsub.f32 %v616, %v654
        %v700 = vsub.f32 %v617, %v658
        %v701 = vsub.f32 %v618, %v654
        %v702 = vsub.f32 %v619, %v658
        %v703 = vsub.f32 %v620, %v654
        %v704 = vsub.f32 %v621, %v658
        %v705 = vsub.f32 %v622, %v654
        %v706 = vsub.f32 %v623, %v658
        %v707 = vsub.f32 %v624, %v654
        %v708 = vsub.f32 %v625, %v658
        %v709 = vsub.f32 %v626, %v654
        %v710 = vsub.f32 %v627, %v658
        %v711 = vsub.f32 %v628, %v654
        %v712 = vsub.f32 %v629, %v658
        %v713 = vsub.f32 %v630, %v654
        %v714 = vsub.f32 %v631, %v658
        %v715 = vsub.f32 %v632, %v654
        %v716 = vsub.f32 %v633, %v658
        %v717 = vsub.f32 %v634, %v654
        %v718 = vsub.f32 %v635, %v658
        %v719 = vsub.f32 %v636, %v654
        %v720 = vsub.f32 %v637, %v658
        %v721 = vsub.f32 %v638, %v654
        %v722 = vsub.f32 %v639, %v658
        %v723 = vmul.f32 %v659, 1.442695
        %v724 = vpow.pop %v723
        %v725 = vmul.f32 %v660, 1.442695
        %v726 = vpow.pop %v725
        %v727 = vmul.f32 %v661, 1.442695
        %v728 = vpow.pop %v727
        %v729 = vmul.f32 %v662, 1.442695
        %v730 = vpow.pop %v729
        %v731 = vmul.f32 %v663, 1.442695
        %v732 = vpow.pop %v731
        %v733 = vmul.f32 %v664, 1.442695
        %v734 = vpow.pop %v733
        %v735 = vmul.f32 %v665, 1.442695
        %v736 = vpow.pop %v735
        %v737 = vmul.f32 %v666, 1.442695
        %v738 = vpow.pop %v737
        %v739 = vmul.f32 %v667, 1.442695
        %v740 = vpow.pop %v739
        %v741 = vmul.f32 %v668, 1.442695
        %v742 = vpow.pop %v741
        %v743 = vmul.f32 %v669, 1.442695
        %v744 = vpow.pop %v743
        %v745 = vmul.f32 %v670, 1.442695
        %v746 = vpow.pop %v745
        %v747 = vmul.f32 %v671, 1.442695
        %v748 = vpow.pop %v747
        %v749 = vmul.f32 %v672, 1.442695
        %v750 = vpow.pop %v749
        %v751 = vmul.f32 %v673, 1.442695
        %v752 = vpow.pop %v751
        %v753 = vmul.f32 %v674, 1.442695
        %v754 = vpow.pop %v753
        %v755 = vmul.f32 %v675, 1.442695
        %v756 = vpow.pop %v755
        %v757 = vmul.f32 %v676, 1.442695
        %v758 = vpow.pop %v757
        %v759 = vmul.f32 %v677, 1.442695
        %v760 = vpow.pop %v759
        %v761 = vmul.f32 %v678, 1.442695
        %v762 = vpow.pop %v761
        %v763 = vmul.f32 %v679, 1.442695
        %v764 = vpow.pop %v763
        %v765 = vmul.f32 %v680, 1.442695
        %v766 = vpow.pop %v765
        %v767 = vmul.f32 %v681, 1.442695
        %v768 = vpow.pop %v767
        %v769 = vmul.f32 %v682, 1.442695
        %v770 = vpow.pop %v769
        %v771 = vmul.f32 %v683, 1.442695
        %v772 = vpow.pop %v771
        %v773 = vmul.f32 %v684, 1.442695
        %v774 = vpow.pop %v773
        %v775 = vmul.f32 %v685, 1.442695
        %v776 = vpow.pop %v775
        %v777 = vmul.f32 %v686, 1.442695
        %v778 = vpow.pop %v777
        %v779 = vmul.f32 %v687, 1.442695
        %v780 = vpow.pop %v779
        %v781 = vmul.f32 %v688, 1.442695
        %v782 = vpow.pop %v781
        %v783 = vmul.f32 %v689, 1.442695
        %v784 = vpow.pop %v783
        %v785 = vmul.f32 %v690, 1.442695
        %v786 = vpow.pop %v785
        %v787 = vmul.f32 %v691, 1.442695
        %v788 = vpow.pop %v787
        %v789 = vmul.f32 %v692, 1.442695
        %v790 = vpow.pop %v789
        %v791 = vmul.f32 %v693, 1.442695
        %v792 = vpow.pop %v791
        %v793 = vmul.f32 %v694, 1.442695
        %v794 = vpow.pop %v793
        %v795 = vmul.f32 %v695, 1.442695
        %v796 = vpow.pop %v795
        %v797 = vmul.f32 %v696, 1.442695
        %v798 = vpow.pop %v797
        %v799 = vmul.f32 %v697, 1.442695
        %v800 = vpow.pop %v799
        %v801 = vmul.f32 %v698, 1.442695
        %v802 = vpow.pop %v801
        %v803 = vmul.f32 %v699, 1.442695
        %v804 = vpow.pop %v803
        %v805 = vmul.f32 %v700, 1.442695
        %v806 = vpow.pop %v805
        %v807 = vmul.f32 %v701, 1.442695
        %v808 = vpow.pop %v807
        %v809 = vmul.f32 %v702, 1.442695
        %v810 = vpow.pop %v809
        %v811 = vmul.f32 %v703, 1.442695
        %v812 = vpow.pop %v811
        %v813 = vmul.f32 %v704, 1.442695
        %v814 = vpow.pop %v813
        %v815 = vmul.f32 %v705, 1.442695
        %v816 = vpow.pop %v815
        %v817 = vmul.f32 %v706, 1.442695
        %v818 = vpow.pop %v817
        %v819 = vmul.f32 %v707, 1.442695
        %v820 = vpow.pop %v819
        %v821 = vmul.f32 %v708, 1.442695
        %v822 = vpow.pop %v821
        %v823 = vmul.f32 %v709, 1.442695
        %v824 = vpow.pop %v823
        %v825 = vmul.f32 %v710, 1.442695
        %v826 = vpow.pop %v825
        %v827 = vmul.f32 %v711, 1.442695
        %v828 = vpow.pop %v827
        %v829 = vmul.f32 %v712, 1.442695
        %v830 = vpow.pop %v829
        %v831 = vmul.f32 %v713, 1.442695
        %v832 = vpow.pop %v831
        %v833 = vmul.f32 %v714, 1.442695
        %v834 = vpow.pop %v833
        %v835 = vmul.f32 %v715, 1.442695
        %v836 = vpow.pop %v835
        %v837 = vmul.f32 %v716, 1.442695
        %v838 = vpow.pop %v837
        %v839 = vmul.f32 %v717, 1.442695
        %v840 = vpow.pop %v839
        %v841 = vmul.f32 %v718, 1.442695
        %v842 = vpow.pop %v841
        %v843 = vmul.f32 %v719, 1.442695
        %v844 = vpow.pop %v843
        %v845 = vmul.f32 %v720, 1.442695
        %v846 = vpow.pop %v845
        %v847 = vmul.f32 %v721, 1.442695
        %v848 = vpow.pop %v847
        %v849 = vmul.f32 %v722, 1.442695
        %v850 = vpow.pop %v849
        %v851 = vpack.c.bf16 %v728, %v724
        %v852 = vpack.c.bf16 %v730, %v726
        %v853 = vpack.c.bf16 %v736, %v732
        %v854 = vpack.c.bf16 %v738, %v734
        %v855 = vpack.c.bf16 %v744, %v740
        %v856 = vpack.c.bf16 %v746, %v742
        %v857 = vpack.c.bf16 %v752, %v748
        %v858 = vpack.c.bf16 %v754, %v750
        %v859 = vpack.c.bf16 %v760, %v756
        %v860 = vpack.c.bf16 %v762, %v758
        %v861 = vpack.c.bf16 %v768, %v764
        %v862 = vpack.c.bf16 %v770, %v766
        %v863 = vpack.c.bf16 %v776, %v772
        %v864 = vpack.c.bf16 %v778, %v774
        %v865 = vpack.c.bf16 %v784, %v780
        %v866 = vpack.c.bf16 %v786, %v782
        %v867 = vpack.c.bf16 %v792, %v788
        %v868 = vpack.c.bf16 %v794, %v790
        %v869 = vpack.c.bf16 %v800, %v796
        %v870 = vpack.c.bf16 %v802, %v798
        %v871 = vpack.c.bf16 %v808, %v804
        %v872 = vpack.c.bf16 %v810, %v806
        %v873 = vpack.c.bf16 %v816, %v812
        %v874 = vpack.c.bf16 %v818, %v814
        %v875 = vpack.c.bf16 %v824, %v820
        %v876 = vpack.c.bf16 %v826, %v822
        %v877 = vpack.c.bf16 %v832, %v828
        %v878 = vpack.c.bf16 %v834, %v830
        %v879 = vpack.c.bf16 %v840, %v836
        %v880 = vpack.c.bf16 %v842, %v838
        %v881 = vpack.c.bf16 %v848, %v844
        %v882 = vpack.c.bf16 %v850, %v846
        %v883 = vld [vmem:[%s335] ss:$4 sm:$0x3]
        %v885 = vlaneseq
        %v886 = vshrl.u32 %v885, 7
        %v887 = vsub.s32 0, %v886
        %v888 = vrot.slane %v883, %v887
        %v889 = vlaneseq
        %v890 = vshrl.u32 %v889, 7
        %v891 = vsub.s32 1, %v890
        %v892 = vrot.slane %v883, %v891
        %vm895 = vcmask 1040384
        %v896 = vsel %vm895, %v888, 1.0
        %v897 = vsel %vm895, %v892, 1.0
        %v898 = vpack.c.bf16 %v896, %v896
        %v899 = vpack.c.bf16 %v897, %v897
        %900 = vmatprep.subr.bf16.mxu0 %v866
        %901 = vmatpush1.bf16.msra.mxu0 %v865
        %902 = vmatprep.subr.bf16.mxu0 %v864
        %903 = vmatpush1.bf16.msra.mxu0 %v863
        %904 = vmatprep.subr.bf16.mxu0 %v862
        %905 = vmatpush1.bf16.msra.mxu0 %v861
        %906 = vmatprep.subr.bf16.mxu0 %v860
        %907 = vmatpush1.bf16.msra.mxu0 %v859
        %908 = vmatprep.subr.bf16.mxu0 %v858
        %909 = vmatpush1.bf16.msra.mxu0 %v857
        %910 = vmatprep.subr.bf16.mxu0 %v856
        %911 = vmatpush1.bf16.msra.mxu0 %v855
        %912 = vmatprep.subr.bf16.mxu0 %v854
        %913 = vmatpush1.bf16.msra.mxu0 %v853
        %914 = vmatprep.subr.bf16.mxu0 %v852
        %915 = vmatpush1.bf16.msra.mxu0 %v851
        %916 = vmatprep.subr.bf16.mxu0 %v882
        %917 = vmatpush2.bf16.msra.mxu0 %v881
        %918 = vmatprep.subr.bf16.mxu0 %v880
        %919 = vmatpush2.bf16.msra.mxu0 %v879
        %920 = vmatprep.subr.bf16.mxu0 %v878
        %921 = vmatpush2.bf16.msra.mxu0 %v877
        %922 = vmatprep.subr.bf16.mxu0 %v876
        %923 = vmatpush2.bf16.msra.mxu0 %v875
        %924 = vmatprep.subr.bf16.mxu0 %v874
        %925 = vmatpush2.bf16.msra.mxu0 %v873
        %926 = vmatprep.subr.bf16.mxu0 %v872
        %927 = vmatpush2.bf16.msra.mxu0 %v871
        %928 = vmatprep.subr.bf16.mxu0 %v870
        %929 = vmatpush2.bf16.msra.mxu0 %v869
        %930 = vmatprep.subr.bf16.mxu0 %v868
        %931 = vmatpush2.bf16.msra.mxu0 %v867
        %932 = vmatprep.mubr.bf16.mxu0 %v899
        %933 = vmatmul.mubr.bf16.gmra.mxu0 %v898
        %v934 = vpop.f32.mrf.mxu0
        %v935 = vadd.f32 0.0, %v934
        %v936 = vpop.f32.mrf.mxu0
        %v937 = vadd.f32 0.0, %v936
        %v938 = vpop.f32.mrf.mxu0
        %v939 = vpop.f32.mrf.mxu0
        %940 = vdwg.mxu0
        %v941 = vlaneseq
        %v942 = vshrl.u32 %v941, 7
        %v943 = vsub.s32 1, %v942
        %v944 = vrot.slane %v358, %v943
        %v945 = vlaneseq
        %v946 = vshrl.u32 %v945, 7
        %v947 = vsub.s32 5, %v946
        %v948 = vrot.slane %v358, %v947
        %v951 = vlaneseq
        %v952 = vshrl.u32 %v951, 7
        %v953 = vsub.s32 1, %v952
        %v954 = vrot.slane %v944, %v953
        %v955 = vlaneseq
        %v956 = vshrl.u32 %v955, 7
        %v957 = vsub.s32 1, %v956
        %v958 = vrot.slane %v948, %v957
        %v959 = vmul.f32 %v400, %v954
        %v960 = vmul.f32 %v400, %v958
        %v961 = vmul.f32 %v405, %v954
        %v962 = vmul.f32 %v405, %v958
        %v963 = vmul.f32 %v410, %v954
        %v964 = vmul.f32 %v410, %v958
        %v965 = vmul.f32 %v415, %v954
        %v966 = vmul.f32 %v415, %v958
        %v967 = vmul.f32 %v420, %v954
        %v968 = vmul.f32 %v420, %v958
        %v969 = vmul.f32 %v425, %v954
        %v970 = vmul.f32 %v425, %v958
        %v971 = vmul.f32 %v430, %v954
        %v972 = vmul.f32 %v430, %v958
        %v973 = vmul.f32 %v435, %v954
        %v974 = vmul.f32 %v435, %v958
        %v975 = vmul.f32 %v440, %v954
        %v976 = vmul.f32 %v440, %v958
        %v977 = vmul.f32 %v445, %v954
        %v978 = vmul.f32 %v445, %v958
        %v979 = vmul.f32 %v450, %v954
        %v980 = vmul.f32 %v450, %v958
        %v981 = vmul.f32 %v455, %v954
        %v982 = vmul.f32 %v455, %v958
        %v983 = vmul.f32 %v460, %v954
        %v984 = vmul.f32 %v460, %v958
        %v985 = vmul.f32 %v465, %v954
        %v986 = vmul.f32 %v465, %v958
        %v987 = vmul.f32 %v470, %v954
        %v988 = vmul.f32 %v470, %v958
        %v989 = vmul.f32 %v475, %v954
        %v990 = vmul.f32 %v475, %v958
        %v991 = vmul.f32 %v480, %v954
        %v992 = vmul.f32 %v480, %v958
        %v993 = vmul.f32 %v485, %v954
        %v994 = vmul.f32 %v485, %v958
        %v995 = vmul.f32 %v490, %v954
        %v996 = vmul.f32 %v490, %v958
        %v997 = vmul.f32 %v495, %v954
        %v998 = vmul.f32 %v495, %v958
        %v999 = vmul.f32 %v500, %v954
        %v1000 = vmul.f32 %v500, %v958
        %v1001 = vmul.f32 %v505, %v954
        %v1002 = vmul.f32 %v505, %v958
        %v1003 = vmul.f32 %v510, %v954
        %v1004 = vmul.f32 %v510, %v958
        %v1005 = vmul.f32 %v515, %v954
        %v1006 = vmul.f32 %v515, %v958
        %v1007 = vmul.f32 %v520, %v954
        %v1008 = vmul.f32 %v520, %v958
        %v1009 = vmul.f32 %v525, %v954
        %v1010 = vmul.f32 %v525, %v958
        %v1011 = vmul.f32 %v530, %v954
        %v1012 = vmul.f32 %v530, %v958
        %v1013 = vmul.f32 %v535, %v954
        %v1014 = vmul.f32 %v535, %v958
        %v1015 = vmul.f32 %v540, %v954
        %v1016 = vmul.f32 %v540, %v958
        %v1017 = vmul.f32 %v545, %v954
        %v1018 = vmul.f32 %v545, %v958
        %v1019 = vmul.f32 %v550, %v954
        %v1020 = vmul.f32 %v550, %v958
        %v1021 = vmul.f32 %v555, %v954
        %v1022 = vmul.f32 %v555, %v958
        %v1023 = vlaneseq
        %v1024 = vshrl.u32 %v1023, 7
        %v1025 = vsub.s32 1, %v1024
        %v1026 = vrot.slane %v396, %v1025
        %v1027 = vlaneseq
        %v1028 = vshrl.u32 %v1027, 7
        %v1029 = vsub.s32 5, %v1028
        %v1030 = vrot.slane %v396, %v1029
        %v1033 = vlaneseq
        %v1034 = vshrl.u32 %v1033, 7
        %v1035 = vsub.s32 1, %v1034
        %v1036 = vrot.slane %v1026, %v1035
        %v1037 = vlaneseq
        %v1038 = vshrl.u32 %v1037, 7
        %v1039 = vsub.s32 1, %v1038
        %v1040 = vrot.slane %v1030, %v1039
        %v1041 = vsub.f32 %v959, %v1036
        %v1042 = vsub.f32 %v960, %v1040
        %v1043 = vsub.f32 %v961, %v1036
        %v1044 = vsub.f32 %v962, %v1040
        %v1045 = vsub.f32 %v963, %v1036
        %v1046 = vsub.f32 %v964, %v1040
        %v1047 = vsub.f32 %v965, %v1036
        %v1048 = vsub.f32 %v966, %v1040
        %v1049 = vsub.f32 %v967, %v1036
        %v1050 = vsub.f32 %v968, %v1040
        %v1051 = vsub.f32 %v969, %v1036
        %v1052 = vsub.f32 %v970, %v1040
        %v1053 = vsub.f32 %v971, %v1036
        %v1054 = vsub.f32 %v972, %v1040
        %v1055 = vsub.f32 %v973, %v1036
        %v1056 = vsub.f32 %v974, %v1040
        %v1057 = vsub.f32 %v975, %v1036
        %v1058 = vsub.f32 %v976, %v1040
        %v1059 = vsub.f32 %v977, %v1036
        %v1060 = vsub.f32 %v978, %v1040
        %v1061 = vsub.f32 %v979, %v1036
        %v1062 = vsub.f32 %v980, %v1040
        %v1063 = vsub.f32 %v981, %v1036
        %v1064 = vsub.f32 %v982, %v1040
        %v1065 = vsub.f32 %v983, %v1036
        %v1066 = vsub.f32 %v984, %v1040
        %v1067 = vsub.f32 %v985, %v1036
        %v1068 = vsub.f32 %v986, %v1040
        %v1069 = vsub.f32 %v987, %v1036
        %v1070 = vsub.f32 %v988, %v1040
        %v1071 = vsub.f32 %v989, %v1036
        %v1072 = vsub.f32 %v990, %v1040
        %v1073 = vsub.f32 %v991, %v1036
        %v1074 = vsub.f32 %v992, %v1040
        %v1075 = vsub.f32 %v993, %v1036
        %v1076 = vsub.f32 %v994, %v1040
        %v1077 = vsub.f32 %v995, %v1036
        %v1078 = vsub.f32 %v996, %v1040
        %v1079 = vsub.f32 %v997, %v1036
        %v1080 = vsub.f32 %v998, %v1040
        %v1081 = vsub.f32 %v999, %v1036
        %v1082 = vsub.f32 %v1000, %v1040
        %v1083 = vsub.f32 %v1001, %v1036
        %v1084 = vsub.f32 %v1002, %v1040
        %v1085 = vsub.f32 %v1003, %v1036
        %v1086 = vsub.f32 %v1004, %v1040
        %v1087 = vsub.f32 %v1005, %v1036
        %v1088 = vsub.f32 %v1006, %v1040
        %v1089 = vsub.f32 %v1007, %v1036
        %v1090 = vsub.f32 %v1008, %v1040
        %v1091 = vsub.f32 %v1009, %v1036
        %v1092 = vsub.f32 %v1010, %v1040
        %v1093 = vsub.f32 %v1011, %v1036
        %v1094 = vsub.f32 %v1012, %v1040
        %v1095 = vsub.f32 %v1013, %v1036
        %v1096 = vsub.f32 %v1014, %v1040
        %v1097 = vsub.f32 %v1015, %v1036
        %v1098 = vsub.f32 %v1016, %v1040
        %v1099 = vsub.f32 %v1017, %v1036
        %v1100 = vsub.f32 %v1018, %v1040
        %v1101 = vsub.f32 %v1019, %v1036
        %v1102 = vsub.f32 %v1020, %v1040
        %v1103 = vsub.f32 %v1021, %v1036
        %v1104 = vsub.f32 %v1022, %v1040
        %v1105 = vmul.f32 %v1041, 1.442695
        %v1106 = vpow.pop %v1105
        %v1107 = vmul.f32 %v1042, 1.442695
        %v1108 = vpow.pop %v1107
        %v1109 = vmul.f32 %v1043, 1.442695
        %v1110 = vpow.pop %v1109
        %v1111 = vmul.f32 %v1044, 1.442695
        %v1112 = vpow.pop %v1111
        %v1113 = vmul.f32 %v1045, 1.442695
        %v1114 = vpow.pop %v1113
        %v1115 = vmul.f32 %v1046, 1.442695
        %v1116 = vpow.pop %v1115
        %v1117 = vmul.f32 %v1047, 1.442695
        %v1118 = vpow.pop %v1117
        %v1119 = vmul.f32 %v1048, 1.442695
        %v1120 = vpow.pop %v1119
        %v1121 = vmul.f32 %v1049, 1.442695
        %v1122 = vpow.pop %v1121
        %v1123 = vmul.f32 %v1050, 1.442695
        %v1124 = vpow.pop %v1123
        %v1125 = vmul.f32 %v1051, 1.442695
        %v1126 = vpow.pop %v1125
        %v1127 = vmul.f32 %v1052, 1.442695
        %v1128 = vpow.pop %v1127
        %v1129 = vmul.f32 %v1053, 1.442695
        %v1130 = vpow.pop %v1129
        %v1131 = vmul.f32 %v1054, 1.442695
        %v1132 = vpow.pop %v1131
        %v1133 = vmul.f32 %v1055, 1.442695
        %v1134 = vpow.pop %v1133
        %v1135 = vmul.f32 %v1056, 1.442695
        %v1136 = vpow.pop %v1135
        %v1137 = vmul.f32 %v1057, 1.442695
        %v1138 = vpow.pop %v1137
        %v1139 = vmul.f32 %v1058, 1.442695
        %v1140 = vpow.pop %v1139
        %v1141 = vmul.f32 %v1059, 1.442695
        %v1142 = vpow.pop %v1141
        %v1143 = vmul.f32 %v1060, 1.442695
        %v1144 = vpow.pop %v1143
        %v1145 = vmul.f32 %v1061, 1.442695
        %v1146 = vpow.pop %v1145
        %v1147 = vmul.f32 %v1062, 1.442695
        %v1148 = vpow.pop %v1147
        %v1149 = vmul.f32 %v1063, 1.442695
        %v1150 = vpow.pop %v1149
        %v1151 = vmul.f32 %v1064, 1.442695
        %v1152 = vpow.pop %v1151
        %v1153 = vmul.f32 %v1065, 1.442695
        %v1154 = vpow.pop %v1153
        %v1155 = vmul.f32 %v1066, 1.442695
        %v1156 = vpow.pop %v1155
        %v1157 = vmul.f32 %v1067, 1.442695
        %v1158 = vpow.pop %v1157
        %v1159 = vmul.f32 %v1068, 1.442695
        %v1160 = vpow.pop %v1159
        %v1161 = vmul.f32 %v1069, 1.442695
        %v1162 = vpow.pop %v1161
        %v1163 = vmul.f32 %v1070, 1.442695
        %v1164 = vpow.pop %v1163
        %v1165 = vmul.f32 %v1071, 1.442695
        %v1166 = vpow.pop %v1165
        %v1167 = vmul.f32 %v1072, 1.442695
        %v1168 = vpow.pop %v1167
        %v1169 = vmul.f32 %v1073, 1.442695
        %v1170 = vpow.pop %v1169
        %v1171 = vmul.f32 %v1074, 1.442695
        %v1172 = vpow.pop %v1171
        %v1173 = vmul.f32 %v1075, 1.442695
        %v1174 = vpow.pop %v1173
        %v1175 = vmul.f32 %v1076, 1.442695
        %v1176 = vpow.pop %v1175
        %v1177 = vmul.f32 %v1077, 1.442695
        %v1178 = vpow.pop %v1177
        %v1179 = vmul.f32 %v1078, 1.442695
        %v1180 = vpow.pop %v1179
        %v1181 = vmul.f32 %v1079, 1.442695
        %v1182 = vpow.pop %v1181
        %v1183 = vmul.f32 %v1080, 1.442695
        %v1184 = vpow.pop %v1183
        %v1185 = vmul.f32 %v1081, 1.442695
        %v1186 = vpow.pop %v1185
        %v1187 = vmul.f32 %v1082, 1.442695
        %v1188 = vpow.pop %v1187
        %v1189 = vmul.f32 %v1083, 1.442695
        %v1190 = vpow.pop %v1189
        %v1191 = vmul.f32 %v1084, 1.442695
        %v1192 = vpow.pop %v1191
        %v1193 = vmul.f32 %v1085, 1.442695
        %v1194 = vpow.pop %v1193
        %v1195 = vmul.f32 %v1086, 1.442695
        %v1196 = vpow.pop %v1195
        %v1197 = vmul.f32 %v1087, 1.442695
        %v1198 = vpow.pop %v1197
        %v1199 = vmul.f32 %v1088, 1.442695
        %v1200 = vpow.pop %v1199
        %v1201 = vmul.f32 %v1089, 1.442695
        %v1202 = vpow.pop %v1201
        %v1203 = vmul.f32 %v1090, 1.442695
        %v1204 = vpow.pop %v1203
        %v1205 = vmul.f32 %v1091, 1.442695
        %v1206 = vpow.pop %v1205
        %v1207 = vmul.f32 %v1092, 1.442695
        %v1208 = vpow.pop %v1207
        %v1209 = vmul.f32 %v1093, 1.442695
        %v1210 = vpow.pop %v1209
        %v1211 = vmul.f32 %v1094, 1.442695
        %v1212 = vpow.pop %v1211
        %v1213 = vmul.f32 %v1095, 1.442695
        %v1214 = vpow.pop %v1213
        %v1215 = vmul.f32 %v1096, 1.442695
        %v1216 = vpow.pop %v1215
        %v1217 = vmul.f32 %v1097, 1.442695
        %v1218 = vpow.pop %v1217
        %v1219 = vmul.f32 %v1098, 1.442695
        %v1220 = vpow.pop %v1219
        %v1221 = vmul.f32 %v1099, 1.442695
        %v1222 = vpow.pop %v1221
        %v1223 = vmul.f32 %v1100, 1.442695
        %v1224 = vpow.pop %v1223
        %v1225 = vmul.f32 %v1101, 1.442695
        %v1226 = vpow.pop %v1225
        %v1227 = vmul.f32 %v1102, 1.442695
        %v1228 = vpow.pop %v1227
        %v1229 = vmul.f32 %v1103, 1.442695
        %v1230 = vpow.pop %v1229
        %v1231 = vmul.f32 %v1104, 1.442695
        %v1232 = vpow.pop %v1231
        %v1233 = vpack.c.bf16 %v1110, %v1106
        %v1234 = vpack.c.bf16 %v1112, %v1108
        %v1235 = vpack.c.bf16 %v1118, %v1114
        %v1236 = vpack.c.bf16 %v1120, %v1116
        %v1237 = vpack.c.bf16 %v1126, %v1122
        %v1238 = vpack.c.bf16 %v1128, %v1124
        %v1239 = vpack.c.bf16 %v1134, %v1130
        %v1240 = vpack.c.bf16 %v1136, %v1132
        %v1241 = vpack.c.bf16 %v1142, %v1138
        %v1242 = vpack.c.bf16 %v1144, %v1140
        %v1243 = vpack.c.bf16 %v1150, %v1146
        %v1244 = vpack.c.bf16 %v1152, %v1148
        %v1245 = vpack.c.bf16 %v1158, %v1154
        %v1246 = vpack.c.bf16 %v1160, %v1156
        %v1247 = vpack.c.bf16 %v1166, %v1162
        %v1248 = vpack.c.bf16 %v1168, %v1164
        %v1249 = vpack.c.bf16 %v1174, %v1170
        %v1250 = vpack.c.bf16 %v1176, %v1172
        %v1251 = vpack.c.bf16 %v1182, %v1178
        %v1252 = vpack.c.bf16 %v1184, %v1180
        %v1253 = vpack.c.bf16 %v1190, %v1186
        %v1254 = vpack.c.bf16 %v1192, %v1188
        %v1255 = vpack.c.bf16 %v1198, %v1194
        %v1256 = vpack.c.bf16 %v1200, %v1196
        %v1257 = vpack.c.bf16 %v1206, %v1202
        %v1258 = vpack.c.bf16 %v1208, %v1204
        %v1259 = vpack.c.bf16 %v1214, %v1210
        %v1260 = vpack.c.bf16 %v1216, %v1212
        %v1261 = vpack.c.bf16 %v1222, %v1218
        %v1262 = vpack.c.bf16 %v1224, %v1220
        %v1263 = vpack.c.bf16 %v1230, %v1226
        %v1264 = vpack.c.bf16 %v1232, %v1228
        %s1265 = scalar_lea.vmem %s335, 1
        %v1266 = vld [vmem:[%s1265] ss:$4 sm:$0x3]
        %v1268 = vlaneseq
        %v1269 = vshrl.u32 %v1268, 7
        %v1270 = vsub.s32 0, %v1269
        %v1271 = vrot.slane %v1266, %v1270
        %v1272 = vlaneseq
        %v1273 = vshrl.u32 %v1272, 7
        %v1274 = vsub.s32 1, %v1273
        %v1275 = vrot.slane %v1266, %v1274
        %v1278 = vsel %vm895, %v1271, 1.0
        %v1279 = vsel %vm895, %v1275, 1.0
        %v1280 = vpack.c.bf16 %v1278, %v1278
        %v1281 = vpack.c.bf16 %v1279, %v1279
        %1282 = vmatprep.subr.bf16.mxu0 %v1248
        %1283 = vmatpush1.bf16.msra.mxu0 %v1247
        %1284 = vmatprep.subr.bf16.mxu0 %v1246
        %1285 = vmatpush1.bf16.msra.mxu0 %v1245
        %1286 = vmatprep.subr.bf16.mxu0 %v1244
        %1287 = vmatpush1.bf16.msra.mxu0 %v1243
        %1288 = vmatprep.subr.bf16.mxu0 %v1242
        %1289 = vmatpush1.bf16.msra.mxu0 %v1241
        %1290 = vmatprep.subr.bf16.mxu0 %v1240
        %1291 = vmatpush1.bf16.msra.mxu0 %v1239
        %1292 = vmatprep.subr.bf16.mxu0 %v1238
        %1293 = vmatpush1.bf16.msra.mxu0 %v1237
        %1294 = vmatprep.subr.bf16.mxu0 %v1236
        %1295 = vmatpush1.bf16.msra.mxu0 %v1235
        %1296 = vmatprep.subr.bf16.mxu0 %v1234
        %1297 = vmatpush1.bf16.msra.mxu0 %v1233
        %1298 = vmatprep.subr.bf16.mxu0 %v1264
        %1299 = vmatpush2.bf16.msra.mxu0 %v1263
        %1300 = vmatprep.subr.bf16.mxu0 %v1262
        %1301 = vmatpush2.bf16.msra.mxu0 %v1261
        %1302 = vmatprep.subr.bf16.mxu0 %v1260
        %1303 = vmatpush2.bf16.msra.mxu0 %v1259
        %1304 = vmatprep.subr.bf16.mxu0 %v1258
        %1305 = vmatpush2.bf16.msra.mxu0 %v1257
        %1306 = vmatprep.subr.bf16.mxu0 %v1256
        %1307 = vmatpush2.bf16.msra.mxu0 %v1255
        %1308 = vmatprep.subr.bf16.mxu0 %v1254
        %1309 = vmatpush2.bf16.msra.mxu0 %v1253
        %1310 = vmatprep.subr.bf16.mxu0 %v1252
        %1311 = vmatpush2.bf16.msra.mxu0 %v1251
        %1312 = vmatprep.subr.bf16.mxu0 %v1250
        %1313 = vmatpush2.bf16.msra.mxu0 %v1249
        %1314 = vmatprep.mubr.bf16.mxu0 %v1281
        %1315 = vmatmul.mubr.bf16.gmra.mxu0 %v1280
        %v1316 = vpop.f32.mrf.mxu0
        %v1317 = vadd.f32 0.0, %v1316
        %v1318 = vpop.f32.mrf.mxu0
        %v1319 = vadd.f32 0.0, %v1318
        %v1320 = vpop.f32.mrf.mxu0
        %v1321 = vpop.f32.mrf.mxu0
        %1322 = vdwg.mxu0
        %v1323 = vlaneseq
        %v1324 = vshrl.u32 %v1323, 7
        %v1325 = vsub.s32 2, %v1324
        %v1326 = vrot.slane %v358, %v1325
        %v1327 = vlaneseq
        %v1328 = vshrl.u32 %v1327, 7
        %v1329 = vsub.s32 6, %v1328
        %v1330 = vrot.slane %v358, %v1329
        %v1333 = vlaneseq
        %v1334 = vshrl.u32 %v1333, 7
        %v1335 = vsub.s32 2, %v1334
        %v1336 = vrot.slane %v1326, %v1335
        %v1337 = vlaneseq
        %v1338 = vshrl.u32 %v1337, 7
        %v1339 = vsub.s32 2, %v1338
        %v1340 = vrot.slane %v1330, %v1339
        %v1341 = vmul.f32 %v400, %v1336
        %v1342 = vmul.f32 %v400, %v1340
        %v1343 = vmul.f32 %v405, %v1336
        %v1344 = vmul.f32 %v405, %v1340
        %v1345 = vmul.f32 %v410, %v1336
        %v1346 = vmul.f32 %v410, %v1340
        %v1347 = vmul.f32 %v415, %v1336
        %v1348 = vmul.f32 %v415, %v1340
        %v1349 = vmul.f32 %v420, %v1336
        %v1350 = vmul.f32 %v420, %v1340
        %v1351 = vmul.f32 %v425, %v1336
        %v1352 = vmul.f32 %v425, %v1340
        %v1353 = vmul.f32 %v430, %v1336
        %v1354 = vmul.f32 %v430, %v1340
        %v1355 = vmul.f32 %v435, %v1336
        %v1356 = vmul.f32 %v435, %v1340
        %v1357 = vmul.f32 %v440, %v1336
        %v1358 = vmul.f32 %v440, %v1340
        %v1359 = vmul.f32 %v445, %v1336
        %v1360 = vmul.f32 %v445, %v1340
        %v1361 = vmul.f32 %v450, %v1336
        %v1362 = vmul.f32 %v450, %v1340
        %v1363 = vmul.f32 %v455, %v1336
        %v1364 = vmul.f32 %v455, %v1340
        %v1365 = vmul.f32 %v460, %v1336
        %v1366 = vmul.f32 %v460, %v1340
        %v1367 = vmul.f32 %v465, %v1336
        %v1368 = vmul.f32 %v465, %v1340
        %v1369 = vmul.f32 %v470, %v1336
        %v1370 = vmul.f32 %v470, %v1340
        %v1371 = vmul.f32 %v475, %v1336
        %v1372 = vmul.f32 %v475, %v1340
        %v1373 = vmul.f32 %v480, %v1336
        %v1374 = vmul.f32 %v480, %v1340
        %v1375 = vmul.f32 %v485, %v1336
        %v1376 = vmul.f32 %v485, %v1340
        %v1377 = vmul.f32 %v490, %v1336
        %v1378 = vmul.f32 %v490, %v1340
        %v1379 = vmul.f32 %v495, %v1336
        %v1380 = vmul.f32 %v495, %v1340
        %v1381 = vmul.f32 %v500, %v1336
        %v1382 = vmul.f32 %v500, %v1340
        %v1383 = vmul.f32 %v505, %v1336
        %v1384 = vmul.f32 %v505, %v1340
        %v1385 = vmul.f32 %v510, %v1336
        %v1386 = vmul.f32 %v510, %v1340
        %v1387 = vmul.f32 %v515, %v1336
        %v1388 = vmul.f32 %v515, %v1340
        %v1389 = vmul.f32 %v520, %v1336
        %v1390 = vmul.f32 %v520, %v1340
        %v1391 = vmul.f32 %v525, %v1336
        %v1392 = vmul.f32 %v525, %v1340
        %v1393 = vmul.f32 %v530, %v1336
        %v1394 = vmul.f32 %v530, %v1340
        %v1395 = vmul.f32 %v535, %v1336
        %v1396 = vmul.f32 %v535, %v1340
        %v1397 = vmul.f32 %v540, %v1336
        %v1398 = vmul.f32 %v540, %v1340
        %v1399 = vmul.f32 %v545, %v1336
        %v1400 = vmul.f32 %v545, %v1340
        %v1401 = vmul.f32 %v550, %v1336
        %v1402 = vmul.f32 %v550, %v1340
        %v1403 = vmul.f32 %v555, %v1336
        %v1404 = vmul.f32 %v555, %v1340
        %v1405 = vlaneseq
        %v1406 = vshrl.u32 %v1405, 7
        %v1407 = vsub.s32 2, %v1406
        %v1408 = vrot.slane %v396, %v1407
        %v1409 = vlaneseq
        %v1410 = vshrl.u32 %v1409, 7
        %v1411 = vsub.s32 6, %v1410
        %v1412 = vrot.slane %v396, %v1411
        %v1415 = vlaneseq
        %v1416 = vshrl.u32 %v1415, 7
        %v1417 = vsub.s32 2, %v1416
        %v1418 = vrot.slane %v1408, %v1417
        %v1419 = vlaneseq
        %v1420 = vshrl.u32 %v1419, 7
        %v1421 = vsub.s32 2, %v1420
        %v1422 = vrot.slane %v1412, %v1421
        %v1423 = vsub.f32 %v1341, %v1418
        %v1424 = vsub.f32 %v1342, %v1422
        %v1425 = vsub.f32 %v1343, %v1418
        %v1426 = vsub.f32 %v1344, %v1422
        %v1427 = vsub.f32 %v1345, %v1418
        %v1428 = vsub.f32 %v1346, %v1422
        %v1429 = vsub.f32 %v1347, %v1418
        %v1430 = vsub.f32 %v1348, %v1422
        %v1431 = vsub.f32 %v1349, %v1418
        %v1432 = vsub.f32 %v1350, %v1422
        %v1433 = vsub.f32 %v1351, %v1418
        %v1434 = vsub.f32 %v1352, %v1422
        %v1435 = vsub.f32 %v1353, %v1418
        %v1436 = vsub.f32 %v1354, %v1422
        %v1437 = vsub.f32 %v1355, %v1418
        %v1438 = vsub.f32 %v1356, %v1422
        %v1439 = vsub.f32 %v1357, %v1418
        %v1440 = vsub.f32 %v1358, %v1422
        %v1441 = vsub.f32 %v1359, %v1418
        %v1442 = vsub.f32 %v1360, %v1422
        %v1443 = vsub.f32 %v1361, %v1418
        %v1444 = vsub.f32 %v1362, %v1422
        %v1445 = vsub.f32 %v1363, %v1418
        %v1446 = vsub.f32 %v1364, %v1422
        %v1447 = vsub.f32 %v1365, %v1418
        %v1448 = vsub.f32 %v1366, %v1422
        %v1449 = vsub.f32 %v1367, %v1418
        %v1450 = vsub.f32 %v1368, %v1422
        %v1451 = vsub.f32 %v1369, %v1418
        %v1452 = vsub.f32 %v1370, %v1422
        %v1453 = vsub.f32 %v1371, %v1418
        %v1454 = vsub.f32 %v1372, %v1422
        %v1455 = vsub.f32 %v1373, %v1418
        %v1456 = vsub.f32 %v1374, %v1422
        %v1457 = vsub.f32 %v1375, %v1418
        %v1458 = vsub.f32 %v1376, %v1422
        %v1459 = vsub.f32 %v1377, %v1418
        %v1460 = vsub.f32 %v1378, %v1422
        %v1461 = vsub.f32 %v1379, %v1418
        %v1462 = vsub.f32 %v1380, %v1422
        %v1463 = vsub.f32 %v1381, %v1418
        %v1464 = vsub.f32 %v1382, %v1422
        %v1465 = vsub.f32 %v1383, %v1418
        %v1466 = vsub.f32 %v1384, %v1422
        %v1467 = vsub.f32 %v1385, %v1418
        %v1468 = vsub.f32 %v1386, %v1422
        %v1469 = vsub.f32 %v1387, %v1418
        %v1470 = vsub.f32 %v1388, %v1422
        %v1471 = vsub.f32 %v1389, %v1418
        %v1472 = vsub.f32 %v1390, %v1422
        %v1473 = vsub.f32 %v1391, %v1418
        %v1474 = vsub.f32 %v1392, %v1422
        %v1475 = vsub.f32 %v1393, %v1418
        %v1476 = vsub.f32 %v1394, %v1422
        %v1477 = vsub.f32 %v1395, %v1418
        %v1478 = vsub.f32 %v1396, %v1422
        %v1479 = vsub.f32 %v1397, %v1418
        %v1480 = vsub.f32 %v1398, %v1422
        %v1481 = vsub.f32 %v1399, %v1418
        %v1482 = vsub.f32 %v1400, %v1422
        %v1483 = vsub.f32 %v1401, %v1418
        %v1484 = vsub.f32 %v1402, %v1422
        %v1485 = vsub.f32 %v1403, %v1418
        %v1486 = vsub.f32 %v1404, %v1422
        %v1487 = vmul.f32 %v1423, 1.442695
        %v1488 = vpow.pop %v1487
        %v1489 = vmul.f32 %v1424, 1.442695
        %v1490 = vpow.pop %v1489
        %v1491 = vmul.f32 %v1425, 1.442695
        %v1492 = vpow.pop %v1491
        %v1493 = vmul.f32 %v1426, 1.442695
        %v1494 = vpow.pop %v1493
        %v1495 = vmul.f32 %v1427, 1.442695
        %v1496 = vpow.pop %v1495
        %v1497 = vmul.f32 %v1428, 1.442695
        %v1498 = vpow.pop %v1497
        %v1499 = vmul.f32 %v1429, 1.442695
        %v1500 = vpow.pop %v1499
        %v1501 = vmul.f32 %v1430, 1.442695
        %v1502 = vpow.pop %v1501
        %v1503 = vmul.f32 %v1431, 1.442695
        %v1504 = vpow.pop %v1503
        %v1505 = vmul.f32 %v1432, 1.442695
        %v1506 = vpow.pop %v1505
        %v1507 = vmul.f32 %v1433, 1.442695
        %v1508 = vpow.pop %v1507
        %v1509 = vmul.f32 %v1434, 1.442695
        %v1510 = vpow.pop %v1509
        %v1511 = vmul.f32 %v1435, 1.442695
        %v1512 = vpow.pop %v1511
        %v1513 = vmul.f32 %v1436, 1.442695
        %v1514 = vpow.pop %v1513
        %v1515 = vmul.f32 %v1437, 1.442695
        %v1516 = vpow.pop %v1515
        %v1517 = vmul.f32 %v1438, 1.442695
        %v1518 = vpow.pop %v1517
        %v1519 = vmul.f32 %v1439, 1.442695
        %v1520 = vpow.pop %v1519
        %v1521 = vmul.f32 %v1440, 1.442695
        %v1522 = vpow.pop %v1521
        %v1523 = vmul.f32 %v1441, 1.442695
        %v1524 = vpow.pop %v1523
        %v1525 = vmul.f32 %v1442, 1.442695
        %v1526 = vpow.pop %v1525
        %v1527 = vmul.f32 %v1443, 1.442695
        %v1528 = vpow.pop %v1527
        %v1529 = vmul.f32 %v1444, 1.442695
        %v1530 = vpow.pop %v1529
        %v1531 = vmul.f32 %v1445, 1.442695
        %v1532 = vpow.pop %v1531
        %v1533 = vmul.f32 %v1446, 1.442695
        %v1534 = vpow.pop %v1533
        %v1535 = vmul.f32 %v1447, 1.442695
        %v1536 = vpow.pop %v1535
        %v1537 = vmul.f32 %v1448, 1.442695
        %v1538 = vpow.pop %v1537
        %v1539 = vmul.f32 %v1449, 1.442695
        %v1540 = vpow.pop %v1539
        %v1541 = vmul.f32 %v1450, 1.442695
        %v1542 = vpow.pop %v1541
        %v1543 = vmul.f32 %v1451, 1.442695
        %v1544 = vpow.pop %v1543
        %v1545 = vmul.f32 %v1452, 1.442695
        %v1546 = vpow.pop %v1545
        %v1547 = vmul.f32 %v1453, 1.442695
        %v1548 = vpow.pop %v1547
        %v1549 = vmul.f32 %v1454, 1.442695
        %v1550 = vpow.pop %v1549
        %v1551 = vmul.f32 %v1455, 1.442695
        %v1552 = vpow.pop %v1551
        %v1553 = vmul.f32 %v1456, 1.442695
        %v1554 = vpow.pop %v1553
        %v1555 = vmul.f32 %v1457, 1.442695
        %v1556 = vpow.pop %v1555
        %v1557 = vmul.f32 %v1458, 1.442695
        %v1558 = vpow.pop %v1557
        %v1559 = vmul.f32 %v1459, 1.442695
        %v1560 = vpow.pop %v1559
        %v1561 = vmul.f32 %v1460, 1.442695
        %v1562 = vpow.pop %v1561
        %v1563 = vmul.f32 %v1461, 1.442695
        %v1564 = vpow.pop %v1563
        %v1565 = vmul.f32 %v1462, 1.442695
        %v1566 = vpow.pop %v1565
        %v1567 = vmul.f32 %v1463, 1.442695
        %v1568 = vpow.pop %v1567
        %v1569 = vmul.f32 %v1464, 1.442695
        %v1570 = vpow.pop %v1569
        %v1571 = vmul.f32 %v1465, 1.442695
        %v1572 = vpow.pop %v1571
        %v1573 = vmul.f32 %v1466, 1.442695
        %v1574 = vpow.pop %v1573
        %v1575 = vmul.f32 %v1467, 1.442695
        %v1576 = vpow.pop %v1575
        %v1577 = vmul.f32 %v1468, 1.442695
        %v1578 = vpow.pop %v1577
        %v1579 = vmul.f32 %v1469, 1.442695
        %v1580 = vpow.pop %v1579
        %v1581 = vmul.f32 %v1470, 1.442695
        %v1582 = vpow.pop %v1581
        %v1583 = vmul.f32 %v1471, 1.442695
        %v1584 = vpow.pop %v1583
        %v1585 = vmul.f32 %v1472, 1.442695
        %v1586 = vpow.pop %v1585
        %v1587 = vmul.f32 %v1473, 1.442695
        %v1588 = vpow.pop %v1587
        %v1589 = vmul.f32 %v1474, 1.442695
        %v1590 = vpow.pop %v1589
        %v1591 = vmul.f32 %v1475, 1.442695
        %v1592 = vpow.pop %v1591
        %v1593 = vmul.f32 %v1476, 1.442695
        %v1594 = vpow.pop %v1593
        %v1595 = vmul.f32 %v1477, 1.442695
        %v1596 = vpow.pop %v1595
        %v1597 = vmul.f32 %v1478, 1.442695
        %v1598 = vpow.pop %v1597
        %v1599 = vmul.f32 %v1479, 1.442695
        %v1600 = vpow.pop %v1599
        %v1601 = vmul.f32 %v1480, 1.442695
        %v1602 = vpow.pop %v1601
        %v1603 = vmul.f32 %v1481, 1.442695
        %v1604 = vpow.pop %v1603
        %v1605 = vmul.f32 %v1482, 1.442695
        %v1606 = vpow.pop %v1605
        %v1607 = vmul.f32 %v1483, 1.442695
        %v1608 = vpow.pop %v1607
        %v1609 = vmul.f32 %v1484, 1.442695
        %v1610 = vpow.pop %v1609
        %v1611 = vmul.f32 %v1485, 1.442695
        %v1612 = vpow.pop %v1611
        %v1613 = vmul.f32 %v1486, 1.442695
        %v1614 = vpow.pop %v1613
        %v1615 = vpack.c.bf16 %v1492, %v1488
        %v1616 = vpack.c.bf16 %v1494, %v1490
        %v1617 = vpack.c.bf16 %v1500, %v1496
        %v1618 = vpack.c.bf16 %v1502, %v1498
        %v1619 = vpack.c.bf16 %v1508, %v1504
        %v1620 = vpack.c.bf16 %v1510, %v1506
        %v1621 = vpack.c.bf16 %v1516, %v1512
        %v1622 = vpack.c.bf16 %v1518, %v1514
        %v1623 = vpack.c.bf16 %v1524, %v1520
        %v1624 = vpack.c.bf16 %v1526, %v1522
        %v1625 = vpack.c.bf16 %v1532, %v1528
        %v1626 = vpack.c.bf16 %v1534, %v1530
        %v1627 = vpack.c.bf16 %v1540, %v1536
        %v1628 = vpack.c.bf16 %v1542, %v1538
        %v1629 = vpack.c.bf16 %v1548, %v1544
        %v1630 = vpack.c.bf16 %v1550, %v1546
        %v1631 = vpack.c.bf16 %v1556, %v1552
        %v1632 = vpack.c.bf16 %v1558, %v1554
        %v1633 = vpack.c.bf16 %v1564, %v1560
        %v1634 = vpack.c.bf16 %v1566, %v1562
        %v1635 = vpack.c.bf16 %v1572, %v1568
        %v1636 = vpack.c.bf16 %v1574, %v1570
        %v1637 = vpack.c.bf16 %v1580, %v1576
        %v1638 = vpack.c.bf16 %v1582, %v1578
        %v1639 = vpack.c.bf16 %v1588, %v1584
        %v1640 = vpack.c.bf16 %v1590, %v1586
        %v1641 = vpack.c.bf16 %v1596, %v1592
        %v1642 = vpack.c.bf16 %v1598, %v1594
        %v1643 = vpack.c.bf16 %v1604, %v1600
        %v1644 = vpack.c.bf16 %v1606, %v1602
        %v1645 = vpack.c.bf16 %v1612, %v1608
        %v1646 = vpack.c.bf16 %v1614, %v1610
        %s1647 = scalar_lea.vmem %s335, 2
        %v1648 = vld [vmem:[%s1647] ss:$4 sm:$0x3]
        %v1650 = vlaneseq
        %v1651 = vshrl.u32 %v1650, 7
        %v1652 = vsub.s32 0, %v1651
        %v1653 = vrot.slane %v1648, %v1652
        %v1654 = vlaneseq
        %v1655 = vshrl.u32 %v1654, 7
        %v1656 = vsub.s32 1, %v1655
        %v1657 = vrot.slane %v1648, %v1656
        %v1660 = vsel %vm895, %v1653, 1.0
        %v1661 = vsel %vm895, %v1657, 1.0
        %v1662 = vpack.c.bf16 %v1660, %v1660
        %v1663 = vpack.c.bf16 %v1661, %v1661
        %1664 = vmatprep.subr.bf16.mxu0 %v1630
        %1665 = vmatpush1.bf16.msra.mxu0 %v1629
        %1666 = vmatprep.subr.bf16.mxu0 %v1628
        %1667 = vmatpush1.bf16.msra.mxu0 %v1627
        %1668 = vmatprep.subr.bf16.mxu0 %v1626
        %1669 = vmatpush1.bf16.msra.mxu0 %v1625
        %1670 = vmatprep.subr.bf16.mxu0 %v1624
        %1671 = vmatpush1.bf16.msra.mxu0 %v1623
        %1672 = vmatprep.subr.bf16.mxu0 %v1622
        %1673 = vmatpush1.bf16.msra.mxu0 %v1621
        %1674 = vmatprep.subr.bf16.mxu0 %v1620
        %1675 = vmatpush1.bf16.msra.mxu0 %v1619
        %1676 = vmatprep.subr.bf16.mxu0 %v1618
        %1677 = vmatpush1.bf16.msra.mxu0 %v1617
        %1678 = vmatprep.subr.bf16.mxu0 %v1616
        %1679 = vmatpush1.bf16.msra.mxu0 %v1615
        %1680 = vmatprep.subr.bf16.mxu0 %v1646
        %1681 = vmatpush2.bf16.msra.mxu0 %v1645
        %1682 = vmatprep.subr.bf16.mxu0 %v1644
        %1683 = vmatpush2.bf16.msra.mxu0 %v1643
        %1684 = vmatprep.subr.bf16.mxu0 %v1642
        %1685 = vmatpush2.bf16.msra.mxu0 %v1641
        %1686 = vmatprep.subr.bf16.mxu0 %v1640
        %1687 = vmatpush2.bf16.msra.mxu0 %v1639
        %1688 = vmatprep.subr.bf16.mxu0 %v1638
        %1689 = vmatpush2.bf16.msra.mxu0 %v1637
        %1690 = vmatprep.subr.bf16.mxu0 %v1636
        %1691 = vmatpush2.bf16.msra.mxu0 %v1635
        %1692 = vmatprep.subr.bf16.mxu0 %v1634
        %1693 = vmatpush2.bf16.msra.mxu0 %v1633
        %1694 = vmatprep.subr.bf16.mxu0 %v1632
        %1695 = vmatpush2.bf16.msra.mxu0 %v1631
        %1696 = vmatprep.mubr.bf16.mxu0 %v1663
        %1697 = vmatmul.mubr.bf16.gmra.mxu0 %v1662
        %v1698 = vpop.f32.mrf.mxu0
        %v1699 = vadd.f32 0.0, %v1698
        %v1700 = vpop.f32.mrf.mxu0
        %v1701 = vadd.f32 0.0, %v1700
        %v1702 = vpop.f32.mrf.mxu0
        %v1703 = vpop.f32.mrf.mxu0
        %1704 = vdwg.mxu0
        %v1705 = vlaneseq
        %v1706 = vshrl.u32 %v1705, 7
        %v1707 = vsub.s32 3, %v1706
        %v1708 = vrot.slane %v358, %v1707
        %v1709 = vlaneseq
        %v1710 = vshrl.u32 %v1709, 7
        %v1711 = vsub.s32 7, %v1710
        %v1712 = vrot.slane %v358, %v1711
        %v1715 = vlaneseq
        %v1716 = vshrl.u32 %v1715, 7
        %v1717 = vsub.s32 3, %v1716
        %v1718 = vrot.slane %v1708, %v1717
        %v1719 = vlaneseq
        %v1720 = vshrl.u32 %v1719, 7
        %v1721 = vsub.s32 3, %v1720
        %v1722 = vrot.slane %v1712, %v1721
        %v1723 = vmul.f32 %v400, %v1718
        %v1724 = vmul.f32 %v400, %v1722
        %v1725 = vmul.f32 %v405, %v1718
        %v1726 = vmul.f32 %v405, %v1722
        %v1727 = vmul.f32 %v410, %v1718
        %v1728 = vmul.f32 %v410, %v1722
        %v1729 = vmul.f32 %v415, %v1718
        %v1730 = vmul.f32 %v415, %v1722
        %v1731 = vmul.f32 %v420, %v1718
        %v1732 = vmul.f32 %v420, %v1722
        %v1733 = vmul.f32 %v425, %v1718
        %v1734 = vmul.f32 %v425, %v1722
        %v1735 = vmul.f32 %v430, %v1718
        %v1736 = vmul.f32 %v430, %v1722
        %v1737 = vmul.f32 %v435, %v1718
        %v1738 = vmul.f32 %v435, %v1722
        %v1739 = vmul.f32 %v440, %v1718
        %v1740 = vmul.f32 %v440, %v1722
        %v1741 = vmul.f32 %v445, %v1718
        %v1742 = vmul.f32 %v445, %v1722
        %v1743 = vmul.f32 %v450, %v1718
        %v1744 = vmul.f32 %v450, %v1722
        %v1745 = vmul.f32 %v455, %v1718
        %v1746 = vmul.f32 %v455, %v1722
        %v1747 = vmul.f32 %v460, %v1718
        %v1748 = vmul.f32 %v460, %v1722
        %v1749 = vmul.f32 %v465, %v1718
        %v1750 = vmul.f32 %v465, %v1722
        %v1751 = vmul.f32 %v470, %v1718
        %v1752 = vmul.f32 %v470, %v1722
        %v1753 = vmul.f32 %v475, %v1718
        %v1754 = vmul.f32 %v475, %v1722
        %v1755 = vmul.f32 %v480, %v1718
        %v1756 = vmul.f32 %v480, %v1722
        %v1757 = vmul.f32 %v485, %v1718
        %v1758 = vmul.f32 %v485, %v1722
        %v1759 = vmul.f32 %v490, %v1718
        %v1760 = vmul.f32 %v490, %v1722
        %v1761 = vmul.f32 %v495, %v1718
        %v1762 = vmul.f32 %v495, %v1722
        %v1763 = vmul.f32 %v500, %v1718
        %v1764 = vmul.f32 %v500, %v1722
        %v1765 = vmul.f32 %v505, %v1718
        %v1766 = vmul.f32 %v505, %v1722
        %v1767 = vmul.f32 %v510, %v1718
        %v1768 = vmul.f32 %v510, %v1722
        %v1769 = vmul.f32 %v515, %v1718
        %v1770 = vmul.f32 %v515, %v1722
        %v1771 = vmul.f32 %v520, %v1718
        %v1772 = vmul.f32 %v520, %v1722
        %v1773 = vmul.f32 %v525, %v1718
        %v1774 = vmul.f32 %v525, %v1722
        %v1775 = vmul.f32 %v530, %v1718
        %v1776 = vmul.f32 %v530, %v1722
        %v1777 = vmul.f32 %v535, %v1718
        %v1778 = vmul.f32 %v535, %v1722
        %v1779 = vmul.f32 %v540, %v1718
        %v1780 = vmul.f32 %v540, %v1722
        %v1781 = vmul.f32 %v545, %v1718
        %v1782 = vmul.f32 %v545, %v1722
        %v1783 = vmul.f32 %v550, %v1718
        %v1784 = vmul.f32 %v550, %v1722
        %v1785 = vmul.f32 %v555, %v1718
        %v1786 = vmul.f32 %v555, %v1722
        %v1787 = vlaneseq
        %v1788 = vshrl.u32 %v1787, 7
        %v1789 = vsub.s32 3, %v1788
        %v1790 = vrot.slane %v396, %v1789
        %v1791 = vlaneseq
        %v1792 = vshrl.u32 %v1791, 7
        %v1793 = vsub.s32 7, %v1792
        %v1794 = vrot.slane %v396, %v1793
        %v1797 = vlaneseq
        %v1798 = vshrl.u32 %v1797, 7
        %v1799 = vsub.s32 3, %v1798
        %v1800 = vrot.slane %v1790, %v1799
        %v1801 = vlaneseq
        %v1802 = vshrl.u32 %v1801, 7
        %v1803 = vsub.s32 3, %v1802
        %v1804 = vrot.slane %v1794, %v1803
        %v1805 = vsub.f32 %v1723, %v1800
        %v1806 = vsub.f32 %v1724, %v1804
        %v1807 = vsub.f32 %v1725, %v1800
        %v1808 = vsub.f32 %v1726, %v1804
        %v1809 = vsub.f32 %v1727, %v1800
        %v1810 = vsub.f32 %v1728, %v1804
        %v1811 = vsub.f32 %v1729, %v1800
        %v1812 = vsub.f32 %v1730, %v1804
        %v1813 = vsub.f32 %v1731, %v1800
        %v1814 = vsub.f32 %v1732, %v1804
        %v1815 = vsub.f32 %v1733, %v1800
        %v1816 = vsub.f32 %v1734, %v1804
        %v1817 = vsub.f32 %v1735, %v1800
        %v1818 = vsub.f32 %v1736, %v1804
        %v1819 = vsub.f32 %v1737, %v1800
        %v1820 = vsub.f32 %v1738, %v1804
        %v1821 = vsub.f32 %v1739, %v1800
        %v1822 = vsub.f32 %v1740, %v1804
        %v1823 = vsub.f32 %v1741, %v1800
        %v1824 = vsub.f32 %v1742, %v1804
        %v1825 = vsub.f32 %v1743, %v1800
        %v1826 = vsub.f32 %v1744, %v1804
        %v1827 = vsub.f32 %v1745, %v1800
        %v1828 = vsub.f32 %v1746, %v1804
        %v1829 = vsub.f32 %v1747, %v1800
        %v1830 = vsub.f32 %v1748, %v1804
        %v1831 = vsub.f32 %v1749, %v1800
        %v1832 = vsub.f32 %v1750, %v1804
        %v1833 = vsub.f32 %v1751, %v1800
        %v1834 = vsub.f32 %v1752, %v1804
        %v1835 = vsub.f32 %v1753, %v1800
        %v1836 = vsub.f32 %v1754, %v1804
        %v1837 = vsub.f32 %v1755, %v1800
        %v1838 = vsub.f32 %v1756, %v1804
        %v1839 = vsub.f32 %v1757, %v1800
        %v1840 = vsub.f32 %v1758, %v1804
        %v1841 = vsub.f32 %v1759, %v1800
        %v1842 = vsub.f32 %v1760, %v1804
        %v1843 = vsub.f32 %v1761, %v1800
        %v1844 = vsub.f32 %v1762, %v1804
        %v1845 = vsub.f32 %v1763, %v1800
        %v1846 = vsub.f32 %v1764, %v1804
        %v1847 = vsub.f32 %v1765, %v1800
        %v1848 = vsub.f32 %v1766, %v1804
        %v1849 = vsub.f32 %v1767, %v1800
        %v1850 = vsub.f32 %v1768, %v1804
        %v1851 = vsub.f32 %v1769, %v1800
        %v1852 = vsub.f32 %v1770, %v1804
        %v1853 = vsub.f32 %v1771, %v1800
        %v1854 = vsub.f32 %v1772, %v1804
        %v1855 = vsub.f32 %v1773, %v1800
        %v1856 = vsub.f32 %v1774, %v1804
        %v1857 = vsub.f32 %v1775, %v1800
        %v1858 = vsub.f32 %v1776, %v1804
        %v1859 = vsub.f32 %v1777, %v1800
        %v1860 = vsub.f32 %v1778, %v1804
        %v1861 = vsub.f32 %v1779, %v1800
        %v1862 = vsub.f32 %v1780, %v1804
        %v1863 = vsub.f32 %v1781, %v1800
        %v1864 = vsub.f32 %v1782, %v1804
        %v1865 = vsub.f32 %v1783, %v1800
        %v1866 = vsub.f32 %v1784, %v1804
        %v1867 = vsub.f32 %v1785, %v1800
        %v1868 = vsub.f32 %v1786, %v1804
        %v1869 = vmul.f32 %v1805, 1.442695
        %v1870 = vpow.pop %v1869
        %v1871 = vmul.f32 %v1806, 1.442695
        %v1872 = vpow.pop %v1871
        %v1873 = vmul.f32 %v1807, 1.442695
        %v1874 = vpow.pop %v1873
        %v1875 = vmul.f32 %v1808, 1.442695
        %v1876 = vpow.pop %v1875
        %v1877 = vmul.f32 %v1809, 1.442695
        %v1878 = vpow.pop %v1877
        %v1879 = vmul.f32 %v1810, 1.442695
        %v1880 = vpow.pop %v1879
        %v1881 = vmul.f32 %v1811, 1.442695
        %v1882 = vpow.pop %v1881
        %v1883 = vmul.f32 %v1812, 1.442695
        %v1884 = vpow.pop %v1883
        %v1885 = vmul.f32 %v1813, 1.442695
        %v1886 = vpow.pop %v1885
        %v1887 = vmul.f32 %v1814, 1.442695
        %v1888 = vpow.pop %v1887
        %v1889 = vmul.f32 %v1815, 1.442695
        %v1890 = vpow.pop %v1889
        %v1891 = vmul.f32 %v1816, 1.442695
        %v1892 = vpow.pop %v1891
        %v1893 = vmul.f32 %v1817, 1.442695
        %v1894 = vpow.pop %v1893
        %v1895 = vmul.f32 %v1818, 1.442695
        %v1896 = vpow.pop %v1895
        %v1897 = vmul.f32 %v1819, 1.442695
        %v1898 = vpow.pop %v1897
        %v1899 = vmul.f32 %v1820, 1.442695
        %v1900 = vpow.pop %v1899
        %v1901 = vmul.f32 %v1821, 1.442695
        %v1902 = vpow.pop %v1901
        %v1903 = vmul.f32 %v1822, 1.442695
        %v1904 = vpow.pop %v1903
        %v1905 = vmul.f32 %v1823, 1.442695
        %v1906 = vpow.pop %v1905
        %v1907 = vmul.f32 %v1824, 1.442695
        %v1908 = vpow.pop %v1907
        %v1909 = vmul.f32 %v1825, 1.442695
        %v1910 = vpow.pop %v1909
        %v1911 = vmul.f32 %v1826, 1.442695
        %v1912 = vpow.pop %v1911
        %v1913 = vmul.f32 %v1827, 1.442695
        %v1914 = vpow.pop %v1913
        %v1915 = vmul.f32 %v1828, 1.442695
        %v1916 = vpow.pop %v1915
        %v1917 = vmul.f32 %v1829, 1.442695
        %v1918 = vpow.pop %v1917
        %v1919 = vmul.f32 %v1830, 1.442695
        %v1920 = vpow.pop %v1919
        %v1921 = vmul.f32 %v1831, 1.442695
        %v1922 = vpow.pop %v1921
        %v1923 = vmul.f32 %v1832, 1.442695
        %v1924 = vpow.pop %v1923
        %v1925 = vmul.f32 %v1833, 1.442695
        %v1926 = vpow.pop %v1925
        %v1927 = vmul.f32 %v1834, 1.442695
        %v1928 = vpow.pop %v1927
        %v1929 = vmul.f32 %v1835, 1.442695
        %v1930 = vpow.pop %v1929
        %v1931 = vmul.f32 %v1836, 1.442695
        %v1932 = vpow.pop %v1931
        %v1933 = vmul.f32 %v1837, 1.442695
        %v1934 = vpow.pop %v1933
        %v1935 = vmul.f32 %v1838, 1.442695
        %v1936 = vpow.pop %v1935
        %v1937 = vmul.f32 %v1839, 1.442695
        %v1938 = vpow.pop %v1937
        %v1939 = vmul.f32 %v1840, 1.442695
        %v1940 = vpow.pop %v1939
        %v1941 = vmul.f32 %v1841, 1.442695
        %v1942 = vpow.pop %v1941
        %v1943 = vmul.f32 %v1842, 1.442695
        %v1944 = vpow.pop %v1943
        %v1945 = vmul.f32 %v1843, 1.442695
        %v1946 = vpow.pop %v1945
        %v1947 = vmul.f32 %v1844, 1.442695
        %v1948 = vpow.pop %v1947
        %v1949 = vmul.f32 %v1845, 1.442695
        %v1950 = vpow.pop %v1949
        %v1951 = vmul.f32 %v1846, 1.442695
        %v1952 = vpow.pop %v1951
        %v1953 = vmul.f32 %v1847, 1.442695
        %v1954 = vpow.pop %v1953
        %v1955 = vmul.f32 %v1848, 1.442695
        %v1956 = vpow.pop %v1955
        %v1957 = vmul.f32 %v1849, 1.442695
        %v1958 = vpow.pop %v1957
        %v1959 = vmul.f32 %v1850, 1.442695
        %v1960 = vpow.pop %v1959
        %v1961 = vmul.f32 %v1851, 1.442695
        %v1962 = vpow.pop %v1961
        %v1963 = vmul.f32 %v1852, 1.442695
        %v1964 = vpow.pop %v1963
        %v1965 = vmul.f32 %v1853, 1.442695
        %v1966 = vpow.pop %v1965
        %v1967 = vmul.f32 %v1854, 1.442695
        %v1968 = vpow.pop %v1967
        %v1969 = vmul.f32 %v1855, 1.442695
        %v1970 = vpow.pop %v1969
        %v1971 = vmul.f32 %v1856, 1.442695
        %v1972 = vpow.pop %v1971
        %v1973 = vmul.f32 %v1857, 1.442695
        %v1974 = vpow.pop %v1973
        %v1975 = vmul.f32 %v1858, 1.442695
        %v1976 = vpow.pop %v1975
        %v1977 = vmul.f32 %v1859, 1.442695
        %v1978 = vpow.pop %v1977
        %v1979 = vmul.f32 %v1860, 1.442695
        %v1980 = vpow.pop %v1979
        %v1981 = vmul.f32 %v1861, 1.442695
        %v1982 = vpow.pop %v1981
        %v1983 = vmul.f32 %v1862, 1.442695
        %v1984 = vpow.pop %v1983
        %v1985 = vmul.f32 %v1863, 1.442695
        %v1986 = vpow.pop %v1985
        %v1987 = vmul.f32 %v1864, 1.442695
        %v1988 = vpow.pop %v1987
        %v1989 = vmul.f32 %v1865, 1.442695
        %v1990 = vpow.pop %v1989
        %v1991 = vmul.f32 %v1866, 1.442695
        %v1992 = vpow.pop %v1991
        %v1993 = vmul.f32 %v1867, 1.442695
        %v1994 = vpow.pop %v1993
        %v1995 = vmul.f32 %v1868, 1.442695
        %v1996 = vpow.pop %v1995
        %v1997 = vpack.c.bf16 %v1874, %v1870
        %v1998 = vpack.c.bf16 %v1876, %v1872
        %v1999 = vpack.c.bf16 %v1882, %v1878
        %v2000 = vpack.c.bf16 %v1884, %v1880
        %v2001 = vpack.c.bf16 %v1890, %v1886
        %v2002 = vpack.c.bf16 %v1892, %v1888
        %v2003 = vpack.c.bf16 %v1898, %v1894
        %v2004 = vpack.c.bf16 %v1900, %v1896
        %v2005 = vpack.c.bf16 %v1906, %v1902
        %v2006 = vpack.c.bf16 %v1908, %v1904
        %v2007 = vpack.c.bf16 %v1914, %v1910
        %v2008 = vpack.c.bf16 %v1916, %v1912
        %v2009 = vpack.c.bf16 %v1922, %v1918
        %v2010 = vpack.c.bf16 %v1924, %v1920
        %v2011 = vpack.c.bf16 %v1930, %v1926
        %v2012 = vpack.c.bf16 %v1932, %v1928
        %v2013 = vpack.c.bf16 %v1938, %v1934
        %v2014 = vpack.c.bf16 %v1940, %v1936
        %v2015 = vpack.c.bf16 %v1946, %v1942
        %v2016 = vpack.c.bf16 %v1948, %v1944
        %v2017 = vpack.c.bf16 %v1954, %v1950
        %v2018 = vpack.c.bf16 %v1956, %v1952
        %v2019 = vpack.c.bf16 %v1962, %v1958
        %v2020 = vpack.c.bf16 %v1964, %v1960
        %v2021 = vpack.c.bf16 %v1970, %v1966
        %v2022 = vpack.c.bf16 %v1972, %v1968
        %v2023 = vpack.c.bf16 %v1978, %v1974
        %v2024 = vpack.c.bf16 %v1980, %v1976
        %v2025 = vpack.c.bf16 %v1986, %v1982
        %v2026 = vpack.c.bf16 %v1988, %v1984
        %v2027 = vpack.c.bf16 %v1994, %v1990
        %v2028 = vpack.c.bf16 %v1996, %v1992
        %s2029 = scalar_lea.vmem %s335, 3
        %v2030 = vld [vmem:[%s2029] ss:$4 sm:$0x3]
        %v2032 = vlaneseq
        %v2033 = vshrl.u32 %v2032, 7
        %v2034 = vsub.s32 0, %v2033
        %v2035 = vrot.slane %v2030, %v2034
        %v2036 = vlaneseq
        %v2037 = vshrl.u32 %v2036, 7
        %v2038 = vsub.s32 1, %v2037
        %v2039 = vrot.slane %v2030, %v2038
        %v2042 = vsel %vm895, %v2035, 1.0
        %v2043 = vsel %vm895, %v2039, 1.0
        %v2044 = vpack.c.bf16 %v2042, %v2042
        %v2045 = vpack.c.bf16 %v2043, %v2043
        %2046 = vmatprep.subr.bf16.mxu0 %v2012
        %2047 = vmatpush1.bf16.msra.mxu0 %v2011
        %2048 = vmatprep.subr.bf16.mxu0 %v2010
        %2049 = vmatpush1.bf16.msra.mxu0 %v2009
        %2050 = vmatprep.subr.bf16.mxu0 %v2008
        %2051 = vmatpush1.bf16.msra.mxu0 %v2007
        %2052 = vmatprep.subr.bf16.mxu0 %v2006
        %2053 = vmatpush1.bf16.msra.mxu0 %v2005
        %2054 = vmatprep.subr.bf16.mxu0 %v2004
        %2055 = vmatpush1.bf16.msra.mxu0 %v2003
        %2056 = vmatprep.subr.bf16.mxu0 %v2002
        %2057 = vmatpush1.bf16.msra.mxu0 %v2001
        %2058 = vmatprep.subr.bf16.mxu0 %v2000
        %2059 = vmatpush1.bf16.msra.mxu0 %v1999
        %2060 = vmatprep.subr.bf16.mxu0 %v1998
        %2061 = vmatpush1.bf16.msra.mxu0 %v1997
        %2062 = vmatprep.subr.bf16.mxu0 %v2028
        %2063 = vmatpush2.bf16.msra.mxu0 %v2027
        %2064 = vmatprep.subr.bf16.mxu0 %v2026
        %2065 = vmatpush2.bf16.msra.mxu0 %v2025
        %2066 = vmatprep.subr.bf16.mxu0 %v2024
        %2067 = vmatpush2.bf16.msra.mxu0 %v2023
        %2068 = vmatprep.subr.bf16.mxu0 %v2022
        %2069 = vmatpush2.bf16.msra.mxu0 %v2021
        %2070 = vmatprep.subr.bf16.mxu0 %v2020
        %2071 = vmatpush2.bf16.msra.mxu0 %v2019
        %2072 = vmatprep.subr.bf16.mxu0 %v2018
        %2073 = vmatpush2.bf16.msra.mxu0 %v2017
        %2074 = vmatprep.subr.bf16.mxu0 %v2016
        %2075 = vmatpush2.bf16.msra.mxu0 %v2015
        %2076 = vmatprep.subr.bf16.mxu0 %v2014
        %2077 = vmatpush2.bf16.msra.mxu0 %v2013
        %2078 = vmatprep.mubr.bf16.mxu0 %v2045
        %2079 = vmatmul.mubr.bf16.gmra.mxu0 %v2044
        %v2080 = vpop.f32.mrf.mxu0
        %v2081 = vadd.f32 0.0, %v2080
        %v2082 = vpop.f32.mrf.mxu0
        %v2083 = vadd.f32 0.0, %v2082
        %v2084 = vpop.f32.mrf.mxu0
        %v2085 = vpop.f32.mrf.mxu0
        %2086 = vdwg.mxu0
        %v2087 = vld [vmem:[#allocation2] sm:$0xff]
        %v2090 = vrot.slane %v1317, 7
        %v2091 = vrot.slane %v1319, 7
        %v2096 = vrot.slane %v1699, 6
        %v2097 = vrot.slane %v1701, 6
        %v2102 = vrot.slane %v2081, 5
        %v2103 = vrot.slane %v2083, 5
        %v2106 = vsel %vm895, %v935, %v2090
        %v2107 = vsel %vm895, %v937, %v2091
        %vm2108 = vcmask 1041408
        %v2109 = vsel %vm2108, %v2106, %v2096
        %v2110 = vsel %vm2108, %v2107, %v2097
        %vm2111 = vcmask 1042432
        %v2112 = vsel %vm2111, %v2109, %v2102
        %v2113 = vsel %vm2111, %v2110, %v2103
        %v2116 = vcombine.low %v2112, %v2113
        %v2118 = vadd.f32 %v2087, %v2116
        %2119 = vst [vmem:[#allocation2] sm:$0xff] %v2118
        %v2120 = vld [vmem:[#allocation3] sm:$0xff]
        %v2123 = vrot.slane %v935, 1
        %v2124 = vrot.slane %v937, 1
        %v2127 = vrot.slane %v1699, 7
        %v2128 = vrot.slane %v1701, 7
        %v2131 = vrot.slane %v2081, 6
        %v2132 = vrot.slane %v2083, 6
        %v2135 = vsel %vm895, %v2123, %v1317
        %v2136 = vsel %vm895, %v2124, %v1319
        %v2137 = vsel %vm2108, %v2135, %v2127
        %v2138 = vsel %vm2108, %v2136, %v2128
        %v2139 = vsel %vm2111, %v2137, %v2131
        %v2140 = vsel %vm2111, %v2138, %v2132
        %v2143 = vcombine.low %v2139, %v2140
        %v2145 = vadd.f32 %v2120, %v2143
        %2146 = vst [vmem:[#allocation3] sm:$0xff] %v2145
        // Predicated region
        $region49: #{tpu_custom_call.1} parent=39 // pred_check
          %p2147 = pneg %p348
        $region50: #{tpu_custom_call.1} parent=39 // pred_check_branch
          %2149 = sbr.rel (%p2147) target = $region52
        $region51: #{tpu_custom_call.1} parent=39 // pred_region
          %s2150 = sld [smem:[#allocation4]]
          %v2151 = vld [vmem:[#allocation2] sm:$0xff]
          %v2152 = vld [vmem:[#allocation3] sm:$0xff]
          %v2153 = vrcp.pop %v2152
          %v2154 = vmul.f32 %v2151, %v2153
          %v2155 = vstv %s2150
          %v2156 = vmul.f32 %v2155, %v2154
          %v2157 = vadd.f32 %v2156, %v358
          %2158 = vst [vmem:[%s316] sm:$0xff] %v2157
        $region52: #{tpu_custom_call.1} parent=39 // pred_fallthru
          _
        %s2159 = sand.u32 %s176, 1
        %s2160 = scalar_lea.sflag [#allocation6], %s2159
        %s2161 = sand.u32 %s176, 1
        %s2162 = smul.addr %s2161, 8
        %s2163 = scalar_lea.vmem [#allocation8], %s2162
        // Predicated region
        $region53: #{tpu_custom_call.1} parent=39 // pred_check
          %p2164 = pneg %p186
        $region54: #{tpu_custom_call.1} parent=39 // pred_check_branch
          %2166 = sbr.rel (%p2164) target = $region56
        $region55: #{tpu_custom_call.1} parent=39 // pred_region
          %s2167 = smul.u32 2, %s27
          %s2169 = ssub.s32 128, 128
          %2170 = vsyncadd %s2160, %s2169
          %s2171 = smul.addr %s26, 2
          %s2172 = sadd.s32 %s2167, %s2171
          %s2173 = smul.addr %s2172, 64
          %s2174 = scalar_lea.hbm %s5, %s2173
          %s2176 = sshll.u32 %s2163, 4
          %s2177 = int_to_ptr.vmem [resolvable:$true] %s2176
          %2179 = dma.vmem_to_hbm [thread:$0]  %s2177, 128, %s2174, %s2160
        $region56: #{tpu_custom_call.1} parent=39 // pred_fallthru
          _
      $region40: #{tpu_custom_call.1} parent=5 // pred_fallthru
        _
      %p2180 = scmp.le.s32.totalorder 2, %s16
      // Predicated region
      $region57: #{tpu_custom_call.1} parent=5 // pred_check
        %p2181 = pneg %p2180
      $region58: #{tpu_custom_call.1} parent=5 // pred_check_branch
        %2183 = sbr.rel (%p2181) target = $region60
      $region59: #{tpu_custom_call.1} parent=5 // pred_region
        %s2184 = ssub.s32 %s16, 2
        // Predicated region
        $region61: #{tpu_custom_call.1} parent=59 // pred_check
          %p2185 = pneg %p192
        $region62: #{tpu_custom_call.1} parent=59 // pred_check_branch
          %2187 = sbr.rel (%p2185) target = $region64
        $region63: #{tpu_custom_call.1} parent=59 // pred_region
          %s2188 = sand.u32 %s177, 1
          %s2189 = scalar_lea.sflag [#allocation6], %s2188
          %s2190 = sand.u32 %s177, 1
          %s2191 = smul.addr %s2190, 8
          %s2192 = scalar_lea.vmem [#allocation8], %s2191
          %2193 = dma.done %s2189, 128
        $region64: #{tpu_custom_call.1} parent=59 // pred_fallthru
          _
      $region60: #{tpu_custom_call.1} parent=5 // pred_fallthru
        _
    $region6: #{tpu_custom_call.1} parent=1 // loop_footer
      %s20 = sadd.s32 1, %s16
    $region7: #{tpu_custom_call.1} parent=1 // loop_footer_branch
      %15 = sbr.rel target = $region3
    $region8: #{tpu_custom_call.1} parent=1 // loop_exit
      _
    %2194 = vsyncpa [#allocation6], 1
    %s2195 = scalar_lea.sflag [#allocation6], 1
    %2196 = vsyncpa %s2195, 1
    %2197 = vsyncpa [#allocation7], 1
    %s2198 = scalar_lea.sflag [#allocation7], 1
    %2199 = vsyncpa %s2198, 1

</llo_original>
